<compile_context>
chip_gen: v7x
topology: tpu7x:2x2x1
jax: 0.10.0
libtpu: 0.0.40
codegen_flags: <defaults>
</compile_context>

<pallas_src>
import functools

import jax
import jax.numpy as jnp
from jax.experimental import pallas as pl
from jax.experimental.pallas import tpu as pltpu

_NC_PAD = 128       # padded class (lane) width of the output slab
_BIAS_COLS = 512    # packed-bias buffer width (widest layer)
_NEG = -1e30        # mask value for padded class columns (exp() underflows to 0 in f32)

# Per-layer logical and lane-padded dims (out dims 64/32/num_classes padded to 128).
_OUT_DIMS_PAD = (512, 256, 128, 128, 128, 128)


def _mlp_kernel(x_ref,
                w1_ref, w2_ref, w3_ref, w4_ref, w5_ref, w6_ref,
                b_ref, o_ref, *, num_classes):
    # Packed biases: row r holds layer r+1's bias, zero-padded to 512 cols, f32.
    b = b_ref[...]                                   # (8, 512)

    # x tile arrives f32; cast to bf16 on the VPU (hidden under the first matmul).
    h = x_ref[...].astype(jnp.bfloat16)              # (tm, in_features)

    def layer(h, w_ref, row, n_out, relu):
        y = jnp.dot(h, w_ref[...], preferred_element_type=jnp.float32)
        y = y + b[row:row + 1, :n_out]               # n_out is always a multiple of 128
        if relu:
            y = jnp.maximum(y, 0.0).astype(jnp.bfloat16)   # bf16 feed for next MXU pass
        return y

    for i, w_ref in enumerate((w1_ref, w2_ref, w3_ref, w4_ref, w5_ref)):
        h = layer(h, w_ref, i, _OUT_DIMS_PAD[i], True)
    logits = layer(h, w6_ref, 5, _NC_PAD, False)     # (tm, 128) f32

    # Mask padded class columns, then numerically stable LogSoftmax(dim=1).
    lane = jax.lax.broadcasted_iota(jnp.int32, logits.shape, 1)
    logits = jnp.where(lane < num_classes, logits, _NEG)
    m = jnp.max(logits, axis=-1, keepdims=True)
    shifted = logits - m
    lse = jnp.log(jnp.sum(jnp.exp(shifted), axis=-1, keepdims=True))
    o_ref[...] = (shifted - lse).astype(o_ref.dtype)


def _round_up(n, m):
    return ((n + m - 1) // m) * m


def _cdiv(a, b):
    return -(-a // b)


def prepare_params(params):
    """One-time packing (call once, outside the per-step path).

    Returns (packed, num_classes): bf16 weights padded to lane width and biases packed
    into a single (8, 512) f32 buffer.
    """
    in_features = params["w1"].shape[0]
    num_classes = params["w6"].shape[1]
    assert num_classes <= _NC_PAD

    dims_in = (in_features, 512, 256, 128, 64, 32)
    dims_out = (512, 256, 128, 64, 32, num_classes)
    pad_in = (in_features, 512, 256, 128, 128, 128)

    packed = {}
    for i in range(6):
        w = params[f"w{i + 1}"].astype(jnp.bfloat16)
        wp = jnp.zeros((pad_in[i], _OUT_DIMS_PAD[i]), jnp.bfloat16)
        packed[f"w{i + 1}"] = wp.at[:dims_in[i], :dims_out[i]].set(w)

    b_pack = jnp.zeros((8, _BIAS_COLS), jnp.float32)
    for i in range(6):
        b_pack = b_pack.at[i, :dims_out[i]].set(params[f"b{i + 1}"].reshape(-1))
    packed["b"] = b_pack

    # Materialize on device now so nothing is re-derived per forward call.
    packed = jax.tree_util.tree_map(jnp.asarray, packed)
    return packed, int(num_classes)


@functools.partial(jax.jit, static_argnames=("num_classes", "tm_max"))
def modified_classifier_forward(x, packed, *, num_classes, tm_max=512):
    """x: (B, C, H, W) float32 (NCHW). Returns (B, num_classes) float32 log-probs."""
    B = x.shape[0]
    x_flat = x.reshape(B, -1)                        # x.view(B, -1); stays f32 (free)
    in_features = x_flat.shape[1]

    # Adaptive batch tile: balance tiles and keep padded-batch waste < 8 rows.
    n_tiles = max(1, _cdiv(B, tm_max))
    tm = min(tm_max, _round_up(_cdiv(B, n_tiles), 8))
    Bp = _round_up(B, tm)
    if Bp != B:
        x_flat = jnp.pad(x_flat, ((0, Bp - B), (0, 0)))

    resident = lambda i: (0, 0)   # same block every step -> stays VMEM-resident
    kernel = functools.partial(_mlp_kernel, num_classes=num_classes)

    # TODO(synk): on v7x, CORE_PARALLEL / core_map could shard the batch grid across both
    # TensorCores; kept plain "parallel" here for portability across v5e/v6e/v7x.
    out_padded = pl.pallas_call(
        kernel,
        out_shape=jax.ShapeDtypeStruct((Bp, _NC_PAD), jnp.float32),
        grid=(Bp // tm,),
        in_specs=[
            pl.BlockSpec((tm, in_features), lambda i: (i, 0)),  # x tile, double-buffered
            pl.BlockSpec(packed["w1"].shape, resident),
            pl.BlockSpec(packed["w2"].shape, resident),
            pl.BlockSpec(packed["w3"].shape, resident),
            pl.BlockSpec(packed["w4"].shape, resident),
            pl.BlockSpec(packed["w5"].shape, resident),
            pl.BlockSpec(packed["w6"].shape, resident),
            pl.BlockSpec(packed["b"].shape, resident),
        ],
        out_specs=pl.BlockSpec((tm, _NC_PAD), lambda i: (i, 0)),
        compiler_params=pltpu.CompilerParams(
            dimension_semantics=("parallel",),
            vmem_limit_bytes=28 * 1024 * 1024),
    )(x_flat, packed["w1"], packed["w2"], packed["w3"],
      packed["w4"], packed["w5"], packed["w6"], packed["b"])

    return out_padded[:B, :num_classes]


def init_params(key, in_features, num_classes):
    """Deterministic init mimicking PyTorch nn.Linear default U(-1/sqrt(fan_in), 1/sqrt(fan_in))."""
    dims = [in_features, 512, 256, 128, 64, 32, num_classes]
    params = {}
    for i in range(6):
        fan_in, fan_out = dims[i], dims[i + 1]
        key, kw, kb = jax.random.split(key, 3)
        bound = 1.0 / jnp.sqrt(jnp.float32(fan_in))
        # stored as (in, out) so the kernel does x @ W (== PyTorch x @ W_pt.T)
        params[f"w{i + 1}"] = jax.random.uniform(
            kw, (fan_in, fan_out), jnp.float32, minval=-bound, maxval=bound)
        params[f"b{i + 1}"] = jax.random.uniform(
            kb, (1, fan_out), jnp.float32, minval=-bound, maxval=bound)
    return params


def _reference_forward(x, params):
    """Pure-JAX f32 reference matching the PyTorch module."""
    h = x.reshape(x.shape[0], -1)
    for i in range(1, 7):
        h = h @ params[f"w{i}"] + params[f"b{i}"]
        if i < 6:
            h = jnp.maximum(h, 0.0)
    return jax.nn.log_softmax(h, axis=-1)


if __name__ == "__main__":
    B, C, H, W = 2, 4, 16, 16
    in_features = C * H * W          # 1024
    num_classes = 10

    key = jax.random.PRNGKey(0)
    key, kx = jax.random.split(key)
    x = jax.random.normal(kx, (B, C, H, W), jnp.float32)
    params = init_params(key, in_features, num_classes)
    packed, nc = prepare_params(params)

    out = jax.block_until_ready(modified_classifier_forward(x, packed, num_classes=nc))
    assert out.shape == (B, num_classes)
    row_sums = jnp.sum(jnp.exp(out), axis=1)        # log-softmax rows must be normalized
    assert bool(jnp.all(jnp.abs(row_sums - 1.0) < 1e-3))
    assert bool(jnp.all(jnp.isfinite(out)))

    # Tolerance check against the pure-JAX f32 reference (kernel uses bf16 weights/acts).
    ref = _reference_forward(x, params)
    assert bool(jnp.all(jnp.abs(out - ref) < 1e-1)), float(jnp.max(jnp.abs(out - ref)))

    # Larger, non-multiple batch exercises the adaptive tiling / padding path.
    xb = jax.random.normal(jax.random.PRNGKey(1), (300, C, H, W), jnp.float32)
    outb = jax.block_until_ready(modified_classifier_forward(xb, packed, num_classes=nc))
    assert outb.shape == (300, num_classes)
    assert bool(jnp.all(jnp.abs(jnp.sum(jnp.exp(outb), axis=1) - 1.0) < 1e-3))
    assert bool(jnp.all(jnp.isfinite(outb)))
    refb = _reference_forward(xb, params)
    assert bool(jnp.all(jnp.abs(outb - refb) < 1e-1))

    print("KERNEL_OK")
</pallas_src>

<mosaic_0001>
module attributes {stable_mosaic.version = 11 : i64} {
  func.func @_mlp_kernel(%arg0: i32, %arg1: memref<8x1024xf32, #tpu.memory_space<vmem>>, %arg2: memref<1024x512xbf16, #tpu.memory_space<vmem>>, %arg3: memref<512x256xbf16, #tpu.memory_space<vmem>>, %arg4: memref<256x128xbf16, #tpu.memory_space<vmem>>, %arg5: memref<128x128xbf16, #tpu.memory_space<vmem>>, %arg6: memref<128x128xbf16, #tpu.memory_space<vmem>>, %arg7: memref<128x128xbf16, #tpu.memory_space<vmem>>, %arg8: memref<8x512xf32, #tpu.memory_space<vmem>>, %arg9: memref<8x128xf32, #tpu.memory_space<vmem>>) attributes {dimension_semantics = [#tpu.dimension_semantics<parallel>], iteration_bounds = array<i64: 1>, scalar_prefetch = 0 : i64, scratch_operands = 0 : i64, tpu.core_type = #tpu.core_type<tc>, window_params = [{transform_indices = @transform_0, window_bounds = array<i64: 8, 1024>}, {pipeline_mode = #tpu.pipeline_mode<synchronous>, transform_indices = @transform_1, window_bounds = array<i64: 1024, 512>}, {pipeline_mode = #tpu.pipeline_mode<synchronous>, transform_indices = @transform_2, window_bounds = array<i64: 512, 256>}, {pipeline_mode = #tpu.pipeline_mode<synchronous>, transform_indices = @transform_3, window_bounds = array<i64: 256, 128>}, {pipeline_mode = #tpu.pipeline_mode<synchronous>, transform_indices = @transform_4, window_bounds = array<i64: 128, 128>}, {pipeline_mode = #tpu.pipeline_mode<synchronous>, transform_indices = @transform_5, window_bounds = array<i64: 128, 128>}, {pipeline_mode = #tpu.pipeline_mode<synchronous>, transform_indices = @transform_6, window_bounds = array<i64: 128, 128>}, {pipeline_mode = #tpu.pipeline_mode<synchronous>, transform_indices = @transform_7, window_bounds = array<i64: 8, 512>}, {transform_indices = @transform_8, window_bounds = array<i64: 8, 128>}]} {
    %c0 = arith.constant 0 : index
    %c0_0 = arith.constant 0 : index
    %0 = vector.load %arg8[%c0, %c0_0] : memref<8x512xf32, #tpu.memory_space<vmem>>, vector<8x512xf32>
    %c0_1 = arith.constant 0 : index
    %c0_2 = arith.constant 0 : index
    %1 = vector.load %arg1[%c0_1, %c0_2] : memref<8x1024xf32, #tpu.memory_space<vmem>>, vector<8x1024xf32>
    %2 = arith.truncf %1 : vector<8x1024xf32> to vector<8x1024xbf16>
    %c0_3 = arith.constant 0 : index
    %c0_4 = arith.constant 0 : index
    %3 = vector.load %arg2[%c0_3, %c0_4] : memref<1024x512xbf16, #tpu.memory_space<vmem>>, vector<1024x512xbf16>
    %cst = arith.constant dense<0.000000e+00> : vector<8x512xf32>
    %4 = tpu.matmul %2, %3, %cst {dimension_numbers = #tpu.dot_dimension_numbers<[1], [0], [0], [1], [0, 0, 1, 1], [], []>} : vector<8x1024xbf16>, vector<1024x512xbf16>, vector<8x512xf32> -> vector<8x512xf32>
    %5 = vector.extract_strided_slice %0 {offsets = [0, 0], sizes = [1, 512], strides = [1, 1]} : vector<8x512xf32> to vector<1x512xf32>
    %6 = vector.broadcast %5 : vector<1x512xf32> to vector<8x512xf32>
    %7 = arith.addf %4, %6 : vector<8x512xf32>
    %cst_5 = arith.constant 0.000000e+00 : f32
    %8 = vector.broadcast %cst_5 : f32 to vector<8x512xf32>
    %9 = arith.maximumf %7, %8 : vector<8x512xf32>
    %10 = arith.truncf %9 : vector<8x512xf32> to vector<8x512xbf16>
    %c0_6 = arith.constant 0 : index
    %c0_7 = arith.constant 0 : index
    %11 = vector.load %arg3[%c0_6, %c0_7] : memref<512x256xbf16, #tpu.memory_space<vmem>>, vector<512x256xbf16>
    %cst_8 = arith.constant dense<0.000000e+00> : vector<8x256xf32>
    %12 = tpu.matmul %10, %11, %cst_8 {dimension_numbers = #tpu.dot_dimension_numbers<[1], [0], [0], [1], [0, 0, 1, 1], [], []>} : vector<8x512xbf16>, vector<512x256xbf16>, vector<8x256xf32> -> vector<8x256xf32>
    %13 = vector.extract_strided_slice %0 {offsets = [1, 0], sizes = [1, 256], strides = [1, 1]} : vector<8x512xf32> to vector<1x256xf32>
    %14 = vector.broadcast %13 : vector<1x256xf32> to vector<8x256xf32>
    %15 = arith.addf %12, %14 : vector<8x256xf32>
    %cst_9 = arith.constant 0.000000e+00 : f32
    %16 = vector.broadcast %cst_9 : f32 to vector<8x256xf32>
    %17 = arith.maximumf %15, %16 : vector<8x256xf32>
    %18 = arith.truncf %17 : vector<8x256xf32> to vector<8x256xbf16>
    %c0_10 = arith.constant 0 : index
    %c0_11 = arith.constant 0 : index
    %19 = vector.load %arg4[%c0_10, %c0_11] : memref<256x128xbf16, #tpu.memory_space<vmem>>, vector<256x128xbf16>
    %cst_12 = arith.constant dense<0.000000e+00> : vector<8x128xf32>
    %20 = tpu.matmul %18, %19, %cst_12 {dimension_numbers = #tpu.dot_dimension_numbers<[1], [0], [0], [1], [0, 0, 1, 1], [], []>} : vector<8x256xbf16>, vector<256x128xbf16>, vector<8x128xf32> -> vector<8x128xf32>
    %21 = vector.extract_strided_slice %0 {offsets = [2, 0], sizes = [1, 128], strides = [1, 1]} : vector<8x512xf32> to vector<1x128xf32>
    %22 = vector.broadcast %21 : vector<1x128xf32> to vector<8x128xf32>
    %23 = arith.addf %20, %22 : vector<8x128xf32>
    %cst_13 = arith.constant 0.000000e+00 : f32
    %24 = vector.broadcast %cst_13 : f32 to vector<8x128xf32>
    %25 = arith.maximumf %23, %24 : vector<8x128xf32>
    %26 = arith.truncf %25 : vector<8x128xf32> to vector<8x128xbf16>
    %c0_14 = arith.constant 0 : index
    %c0_15 = arith.constant 0 : index
    %27 = vector.load %arg5[%c0_14, %c0_15] : memref<128x128xbf16, #tpu.memory_space<vmem>>, vector<128x128xbf16>
    %cst_16 = arith.constant dense<0.000000e+00> : vector<8x128xf32>
    %28 = tpu.matmul %26, %27, %cst_16 {dimension_numbers = #tpu.dot_dimension_numbers<[1], [0], [0], [1], [0, 0, 1, 1], [], []>} : vector<8x128xbf16>, vector<128x128xbf16>, vector<8x128xf32> -> vector<8x128xf32>
    %29 = vector.extract_strided_slice %0 {offsets = [3, 0], sizes = [1, 128], strides = [1, 1]} : vector<8x512xf32> to vector<1x128xf32>
    %30 = vector.broadcast %29 : vector<1x128xf32> to vector<8x128xf32>
    %31 = arith.addf %28, %30 : vector<8x128xf32>
    %cst_17 = arith.constant 0.000000e+00 : f32
    %32 = vector.broadcast %cst_17 : f32 to vector<8x128xf32>
    %33 = arith.maximumf %31, %32 : vector<8x128xf32>
    %34 = arith.truncf %33 : vector<8x128xf32> to vector<8x128xbf16>
    %c0_18 = arith.constant 0 : index
    %c0_19 = arith.constant 0 : index
    %35 = vector.load %arg6[%c0_18, %c0_19] : memref<128x128xbf16, #tpu.memory_space<vmem>>, vector<128x128xbf16>
    %cst_20 = arith.constant dense<0.000000e+00> : vector<8x128xf32>
    %36 = tpu.matmul %34, %35, %cst_20 {dimension_numbers = #tpu.dot_dimension_numbers<[1], [0], [0], [1], [0, 0, 1, 1], [], []>} : vector<8x128xbf16>, vector<128x128xbf16>, vector<8x128xf32> -> vector<8x128xf32>
    %37 = vector.extract_strided_slice %0 {offsets = [4, 0], sizes = [1, 128], strides = [1, 1]} : vector<8x512xf32> to vector<1x128xf32>
    %38 = vector.broadcast %37 : vector<1x128xf32> to vector<8x128xf32>
    %39 = arith.addf %36, %38 : vector<8x128xf32>
    %cst_21 = arith.constant 0.000000e+00 : f32
    %40 = vector.broadcast %cst_21 : f32 to vector<8x128xf32>
    %41 = arith.maximumf %39, %40 : vector<8x128xf32>
    %42 = arith.truncf %41 : vector<8x128xf32> to vector<8x128xbf16>
    %c0_22 = arith.constant 0 : index
    %c0_23 = arith.constant 0 : index
    %43 = vector.load %arg7[%c0_22, %c0_23] : memref<128x128xbf16, #tpu.memory_space<vmem>>, vector<128x128xbf16>
    %cst_24 = arith.constant dense<0.000000e+00> : vector<8x128xf32>
    %44 = tpu.matmul %42, %43, %cst_24 {dimension_numbers = #tpu.dot_dimension_numbers<[1], [0], [0], [1], [0, 0, 1, 1], [], []>} : vector<8x128xbf16>, vector<128x128xbf16>, vector<8x128xf32> -> vector<8x128xf32>
    %45 = vector.extract_strided_slice %0 {offsets = [5, 0], sizes = [1, 128], strides = [1, 1]} : vector<8x512xf32> to vector<1x128xf32>
    %46 = vector.broadcast %45 : vector<1x128xf32> to vector<8x128xf32>
    %47 = arith.addf %44, %46 : vector<8x128xf32>
    %48 = tpu.iota {dimensions = array<i32: 1>} : vector<8x128xi32>
    %c10_i32 = arith.constant 10 : i32
    %49 = vector.broadcast %c10_i32 : i32 to vector<8x128xi32>
    %50 = arith.cmpi slt, %48, %49 : vector<8x128xi32>
    %cst_25 = arith.constant -1.000000e+30 : f32
    %51 = vector.broadcast %cst_25 : f32 to vector<8x128xf32>
    %52 = arith.select %50, %47, %51 : vector<8x128xi1>, vector<8x128xf32>
    %cst_26 = arith.constant dense<0xFF800000> : vector<8xf32>
    %53 = vector.multi_reduction <maximumf>, %52, %cst_26 [1] : vector<8x128xf32> to vector<8xf32>
    %54 = vector.shape_cast %53 : vector<8xf32> to vector<8x1xf32>
    %55 = vector.broadcast %54 : vector<8x1xf32> to vector<8x128xf32>
    %56 = arith.subf %52, %55 : vector<8x128xf32>
    %57 = math.exp %56 : vector<8x128xf32>
    %cst_27 = arith.constant dense<0.000000e+00> : vector<8xf32>
    %58 = vector.multi_reduction <add>, %57, %cst_27 [1] : vector<8x128xf32> to vector<8xf32>
    %59 = vector.shape_cast %58 : vector<8xf32> to vector<8x1xf32>
    %60 = math.log %59 : vector<8x1xf32>
    %61 = vector.broadcast %60 : vector<8x1xf32> to vector<8x128xf32>
    %62 = arith.subf %56, %61 : vector<8x128xf32>
    %c0_28 = arith.constant 0 : index
    %c0_29 = arith.constant 0 : index
    %63 = vector.load %arg9[%c0_28, %c0_29] : memref<8x128xf32, #tpu.memory_space<vmem>>, vector<8x128xf32>
    tpu.vector_store %arg9[%c0_28, %c0_29], %62 {strides = array<i32>} : memref<8x128xf32, #tpu.memory_space<vmem>>, vector<8x128xf32>,
    return
  }
  func.func @transform_0(%arg0: i32) -> (i32, i32) {
    %c0_i32 = arith.constant 0 : i32
    %c0_i32_0 = arith.constant 0 : i32
    return %arg0, %c0_i32 : i32, i32
  }
  func.func @transform_1(%arg0: i32) -> (i32, i32) {
    %c0_i32 = arith.constant 0 : i32
    %c0_i32_0 = arith.constant 0 : i32
    %c0_i32_1 = arith.constant 0 : i32
    return %c0_i32, %c0_i32_0 : i32, i32
  }
  func.func @transform_2(%arg0: i32) -> (i32, i32) {
    %c0_i32 = arith.constant 0 : i32
    %c0_i32_0 = arith.constant 0 : i32
    %c0_i32_1 = arith.constant 0 : i32
    return %c0_i32, %c0_i32_0 : i32, i32
  }
  func.func @transform_3(%arg0: i32) -> (i32, i32) {
    %c0_i32 = arith.constant 0 : i32
    %c0_i32_0 = arith.constant 0 : i32
    %c0_i32_1 = arith.constant 0 : i32
    return %c0_i32, %c0_i32_0 : i32, i32
  }
  func.func @transform_4(%arg0: i32) -> (i32, i32) {
    %c0_i32 = arith.constant 0 : i32
    %c0_i32_0 = arith.constant 0 : i32
    %c0_i32_1 = arith.constant 0 : i32
    return %c0_i32, %c0_i32_0 : i32, i32
  }
  func.func @transform_5(%arg0: i32) -> (i32, i32) {
    %c0_i32 = arith.constant 0 : i32
    %c0_i32_0 = arith.constant 0 : i32
    %c0_i32_1 = arith.constant 0 : i32
    return %c0_i32, %c0_i32_0 : i32, i32
  }
  func.func @transform_6(%arg0: i32) -> (i32, i32) {
    %c0_i32 = arith.constant 0 : i32
    %c0_i32_0 = arith.constant 0 : i32
    %c0_i32_1 = arith.constant 0 : i32
    return %c0_i32, %c0_i32_0 : i32, i32
  }
  func.func @transform_7(%arg0: i32) -> (i32, i32) {
    %c0_i32 = arith.constant 0 : i32
    %c0_i32_0 = arith.constant 0 : i32
    %c0_i32_1 = arith.constant 0 : i32
    return %c0_i32, %c0_i32_0 : i32, i32
  }
  func.func @transform_8(%arg0: i32) -> (i32, i32) {
    %c0_i32 = arith.constant 0 : i32
    %c0_i32_0 = arith.constant 0 : i32
    return %arg0, %c0_i32 : i32, i32
  }
}

</mosaic_0001>

<llo_original>
// kernel: modified_classifier_forward.1
$region0: #{modified_classifier_forward.1}
  #allocation0 [shape = 'u32[]', space=smem, size = 0x4, offset = 0x4, fixed_abs, tag = 'smem constant byte address 0x4 - core index']
  #allocation1 [shape = 'u32[144,128]{1,0:T(1,128)}', space=vmem, size = 0x12000, scoped, tag = 'internal scratch']
  %s0 = inlined_call_operand.vmem [shape: f32[8,1024], index: 0, kind: input, shape index: {}]
  %s1 = inlined_call_operand.hbm [shape: bf16[1024,512], index: 1, kind: input, shape index: {}]
  %s2 = inlined_call_operand.hbm [shape: bf16[512,256], index: 2, kind: input, shape index: {}]
  %s3 = inlined_call_operand.vmem [shape: bf16[256,128], index: 3, kind: input, shape index: {}]
  %s4 = inlined_call_operand.vmem [shape: bf16[128,128], index: 4, kind: input, shape index: {}]
  %s5 = inlined_call_operand.hbm [shape: bf16[128,128], index: 5, kind: input, shape index: {}]
  %s6 = inlined_call_operand.hbm [shape: bf16[128,128], index: 6, kind: input, shape index: {}]
  %s7 = inlined_call_operand.vmem [shape: f32[8,512], index: 7, kind: input, shape index: {}]
  %s8 = inlined_call_operand.vmem [shape: f32[8,128], index: 8, kind: output, shape index: {}]
  %s9 = sld [smem:[#allocation0]]
  $region58: #{modified_classifier_forward.1} parent=0
    _
  %s11 = ssub.s32 1, %s9
  %s12 = scalar_select 0, %s11, %s9
  $region1: #{modified_classifier_forward.1} parent=0
    #allocation2 [shape = 'u8[1048576]{0}', space=vmem, size = 0x100000, scoped, tag = 'input window, operand 1, single buffered']
    #allocation3 [shape = 's32[1]{0}', space=sflag, size = 0x4, scoped, tag = 'scoped memory for modified_classifier_forward.1']
    #allocation4 [shape = 'u8[262144]{0}', space=vmem, size = 0x40000, scoped, tag = 'input window, operand 2, single buffered']
    #allocation5 [shape = 's32[1]{0}', space=sflag, size = 0x4, scoped, tag = 'scoped memory for modified_classifier_forward.1']
    #allocation6 [shape = 'u8[32768]{0}', space=vmem, size = 0x8000, scoped, tag = 'input window, operand 5, single buffered']
    #allocation7 [shape = 'u8[32768]{0}', space=vmem, size = 0x8000, scoped, tag = 'input window, operand 6, single buffered']
    #allocation8 [shape = 's32[1]{0}', space=sflag, size = 0x4, scoped, tag = 'scoped memory for modified_classifier_forward.1']
    %13 = vsyncpa [#allocation3], 0
    %14 = vsyncpa [#allocation5], 0
    %15 = vsyncpa [#allocation8], 0
    // Predicated region
    $region2: #{modified_classifier_forward.1} parent=1 // pred_check
      _
    $region3: #{modified_classifier_forward.1} parent=1 // pred_check_branch
      %17 = sbr.rel (0) target = $region5
    $region4: #{modified_classifier_forward.1} parent=1 // pred_region
      _
    $region5: #{modified_classifier_forward.1} parent=1 // pred_fallthru
      _
    // Predicated region
    $region6: #{modified_classifier_forward.1} parent=1 // pred_check
      _
    $region7: #{modified_classifier_forward.1} parent=1 // pred_check_branch
      %19 = sbr.rel (0) target = $region9
    $region8: #{modified_classifier_forward.1} parent=1 // pred_region
      %s21 = ssub.s32 32768, 32768
      %22 = vsyncadd [#allocation3], %s21
      %s23 = sshll.u32 [#allocation2], 4
      %s24 = int_to_ptr.vmem [resolvable:$true] %s23
      %29 = dma.hbm_to_vmem [thread:$0]  %s1, 32768, %s24, [#allocation3], 256, 256, 16
    $region9: #{modified_classifier_forward.1} parent=1 // pred_fallthru
      _
    // Predicated region
    $region10: #{modified_classifier_forward.1} parent=1 // pred_check
      _
    $region11: #{modified_classifier_forward.1} parent=1 // pred_check_branch
      %31 = sbr.rel (0) target = $region13
    $region12: #{modified_classifier_forward.1} parent=1 // pred_region
      %s33 = ssub.s32 8192, 8192
      %34 = vsyncadd [#allocation5], %s33
      %s35 = sshll.u32 [#allocation4], 4
      %s36 = int_to_ptr.vmem [resolvable:$true] %s35
      %41 = dma.hbm_to_vmem [thread:$0]  %s2, 8192, %s36, [#allocation5], 128, 128, 8
    $region13: #{modified_classifier_forward.1} parent=1 // pred_fallthru
      _
    // Predicated region
    $region14: #{modified_classifier_forward.1} parent=1 // pred_check
      _
    $region15: #{modified_classifier_forward.1} parent=1 // pred_check_branch
      %43 = sbr.rel (0) target = $region17
    $region16: #{modified_classifier_forward.1} parent=1 // pred_region
      _
    $region17: #{modified_classifier_forward.1} parent=1 // pred_fallthru
      _
    // Predicated region
    $region18: #{modified_classifier_forward.1} parent=1 // pred_check
      _
    $region19: #{modified_classifier_forward.1} parent=1 // pred_check_branch
      %45 = sbr.rel (0) target = $region21
    $region20: #{modified_classifier_forward.1} parent=1 // pred_region
      _
    $region21: #{modified_classifier_forward.1} parent=1 // pred_fallthru
      _
    // Predicated region
    $region22: #{modified_classifier_forward.1} parent=1 // pred_check
      _
    $region23: #{modified_classifier_forward.1} parent=1 // pred_check_branch
      %47 = sbr.rel (0) target = $region25
    $region24: #{modified_classifier_forward.1} parent=1 // pred_region
      %s49 = ssub.s32 1024, 1024
      %50 = vsyncadd [#allocation5], %s49
      %s51 = sshll.u32 [#allocation6], 4
      %s52 = int_to_ptr.vmem [resolvable:$true] %s51
      %57 = dma.hbm_to_vmem [thread:$0]  %s5, 1024, %s52, [#allocation5], 64, 64, 4
    $region25: #{modified_classifier_forward.1} parent=1 // pred_fallthru
      _
    // Predicated region
    $region26: #{modified_classifier_forward.1} parent=1 // pred_check
      _
    $region27: #{modified_classifier_forward.1} parent=1 // pred_check_branch
      %59 = sbr.rel (0) target = $region29
    $region28: #{modified_classifier_forward.1} parent=1 // pred_region
      %s61 = ssub.s32 1024, 1024
      %62 = vsyncadd [#allocation8], %s61
      %s63 = sshll.u32 [#allocation7], 4
      %s64 = int_to_ptr.vmem [resolvable:$true] %s63
      %69 = dma.hbm_to_vmem [thread:$0]  %s6, 1024, %s64, [#allocation8], 64, 64, 4
    $region29: #{modified_classifier_forward.1} parent=1 // pred_fallthru
      _
    // Predicated region
    $region30: #{modified_classifier_forward.1} parent=1 // pred_check
      _
    $region31: #{modified_classifier_forward.1} parent=1 // pred_check_branch
      %71 = sbr.rel (0) target = $region33
    $region32: #{modified_classifier_forward.1} parent=1 // pred_region
      _
    $region33: #{modified_classifier_forward.1} parent=1 // pred_fallthru
      _
    // Predicated region
    $region34: #{modified_classifier_forward.1} parent=1 // pred_check
      _
    $region35: #{modified_classifier_forward.1} parent=1 // pred_check_branch
      %73 = sbr.rel (0) target = $region37
    $region36: #{modified_classifier_forward.1} parent=1 // pred_region
      %74 = dma.done [#allocation3], 32768
    $region37: #{modified_classifier_forward.1} parent=1 // pred_fallthru
      _
    // Predicated region
    $region38: #{modified_classifier_forward.1} parent=1 // pred_check
      _
    $region39: #{modified_classifier_forward.1} parent=1 // pred_check_branch
      %76 = sbr.rel (0) target = $region41
    $region40: #{modified_classifier_forward.1} parent=1 // pred_region
      %77 = dma.done [#allocation5], 8192
    $region41: #{modified_classifier_forward.1} parent=1 // pred_fallthru
      _
    // Predicated region
    $region42: #{modified_classifier_forward.1} parent=1 // pred_check
      _
    $region43: #{modified_classifier_forward.1} parent=1 // pred_check_branch
      %79 = sbr.rel (0) target = $region45
    $region44: #{modified_classifier_forward.1} parent=1 // pred_region
      %80 = dma.done [#allocation5], 1024
    $region45: #{modified_classifier_forward.1} parent=1 // pred_fallthru
      _
    // Predicated region
    $region46: #{modified_classifier_forward.1} parent=1 // pred_check
      _
    $region47: #{modified_classifier_forward.1} parent=1 // pred_check_branch
      %82 = sbr.rel (0) target = $region49
    $region48: #{modified_classifier_forward.1} parent=1 // pred_region
      %83 = dma.done [#allocation8], 1024
    $region49: #{modified_classifier_forward.1} parent=1 // pred_fallthru
      _
    %v85 = vld [vmem:[%s7] sm:$0xff]
    %v86 = vld [vmem:[%s7 + $0x8] sm:$0xff]
    %v87 = vld [vmem:[%s7 + $0x10] sm:$0xff]
    %v88 = vld [vmem:[%s7 + $0x18] sm:$0xff]
    %v89 = vld [vmem:[%s0] sm:$0xff]
    %v90 = vld [vmem:[%s0 + $0x8] sm:$0xff]
    %v91 = vld [vmem:[%s0 + $0x10] sm:$0xff]
    %v92 = vld [vmem:[%s0 + $0x18] sm:$0xff]
    %v93 = vld [vmem:[%s0 + $0x20] sm:$0xff]
    %v94 = vld [vmem:[%s0 + $0x28] sm:$0xff]
    %v95 = vld [vmem:[%s0 + $0x30] sm:$0xff]
    %v96 = vld [vmem:[%s0 + $0x38] sm:$0xff]
    %v97 = vpack.c.bf16 %v89, %v89
    %v98 = vpack.c.bf16 %v90, %v90
    %v99 = vpack.c.bf16 %v91, %v91
    %v100 = vpack.c.bf16 %v92, %v92
    %v101 = vpack.c.bf16 %v93, %v93
    %v102 = vpack.c.bf16 %v94, %v94
    %v103 = vpack.c.bf16 %v95, %v95
    %v104 = vpack.c.bf16 %v96, %v96
    %v105 = vld [vmem:[#allocation2] sm:$0xff]
    %v106 = vld [vmem:[#allocation2 + $0x8] sm:$0xff]
    %v107 = vld [vmem:[#allocation2 + $0x10] sm:$0xff]
    %v108 = vld [vmem:[#allocation2 + $0x18] sm:$0xff]
    %v109 = vld [vmem:[#allocation2 + $0x20] sm:$0xff]
    %v110 = vld [vmem:[#allocation2 + $0x28] sm:$0xff]
    %v111 = vld [vmem:[#allocation2 + $0x30] sm:$0xff]
    %v112 = vld [vmem:[#allocation2 + $0x38] sm:$0xff]
    %v113 = vld [vmem:[#allocation2 + $0x40] sm:$0xff]
    %v114 = vld [vmem:[#allocation2 + $0x48] sm:$0xff]
    %v115 = vld [vmem:[#allocation2 + $0x50] sm:$0xff]
    %v116 = vld [vmem:[#allocation2 + $0x58] sm:$0xff]
    %v117 = vld [vmem:[#allocation2 + $0x60] sm:$0xff]
    %v118 = vld [vmem:[#allocation2 + $0x68] sm:$0xff]
    %v119 = vld [vmem:[#allocation2 + $0x70] sm:$0xff]
    %v120 = vld [vmem:[#allocation2 + $0x78] sm:$0xff]
    %v121 = vld [vmem:[#allocation2 + $0x80] sm:$0xff]
    %v122 = vld [vmem:[#allocation2 + $0x88] sm:$0xff]
    %v123 = vld [vmem:[#allocation2 + $0x90] sm:$0xff]
    %v124 = vld [vmem:[#allocation2 + $0x98] sm:$0xff]
    %v125 = vld [vmem:[#allocation2 + $0xa0] sm:$0xff]
    %v126 = vld [vmem:[#allocation2 + $0xa8] sm:$0xff]
    %v127 = vld [vmem:[#allocation2 + $0xb0] sm:$0xff]
    %v128 = vld [vmem:[#allocation2 + $0xb8] sm:$0xff]
    %v129 = vld [vmem:[#allocation2 + $0xc0] sm:$0xff]
    %v130 = vld [vmem:[#allocation2 + $0xc8] sm:$0xff]
    %v131 = vld [vmem:[#allocation2 + $0xd0] sm:$0xff]
    %v132 = vld [vmem:[#allocation2 + $0xd8] sm:$0xff]
    %v133 = vld [vmem:[#allocation2 + $0xe0] sm:$0xff]
    %v134 = vld [vmem:[#allocation2 + $0xe8] sm:$0xff]
    %v135 = vld [vmem:[#allocation2 + $0xf0] sm:$0xff]
    %v136 = vld [vmem:[#allocation2 + $0xf8] sm:$0xff]
    %v137 = vld [vmem:[#allocation2 + $0x100] sm:$0xff]
    %v138 = vld [vmem:[#allocation2 + $0x108] sm:$0xff]
    %v139 = vld [vmem:[#allocation2 + $0x110] sm:$0xff]
    %v140 = vld [vmem:[#allocation2 + $0x118] sm:$0xff]
    %v141 = vld [vmem:[#allocation2 + $0x120] sm:$0xff]
    %v142 = vld [vmem:[#allocation2 + $0x128] sm:$0xff]
    %v143 = vld [vmem:[#allocation2 + $0x130] sm:$0xff]
    %v144 = vld [vmem:[#allocation2 + $0x138] sm:$0xff]
    %v145 = vld [vmem:[#allocation2 + $0x140] sm:$0xff]
    %v146 = vld [vmem:[#allocation2 + $0x148] sm:$0xff]
    %v147 = vld [vmem:[#allocation2 + $0x150] sm:$0xff]
    %v148 = vld [vmem:[#allocation2 + $0x158] sm:$0xff]
    %v149 = vld [vmem:[#allocation2 + $0x160] sm:$0xff]
    %v150 = vld [vmem:[#allocation2 + $0x168] sm:$0xff]
    %v151 = vld [vmem:[#allocation2 + $0x170] sm:$0xff]
    %v152 = vld [vmem:[#allocation2 + $0x178] sm:$0xff]
    %v153 = vld [vmem:[#allocation2 + $0x180] sm:$0xff]
    %v154 = vld [vmem:[#allocation2 + $0x188] sm:$0xff]
    %v155 = vld [vmem:[#allocation2 + $0x190] sm:$0xff]
    %v156 = vld [vmem:[#allocation2 + $0x198] sm:$0xff]
    %v157 = vld [vmem:[#allocation2 + $0x1a0] sm:$0xff]
    %v158 = vld [vmem:[#allocation2 + $0x1a8] sm:$0xff]
    %v159 = vld [vmem:[#allocation2 + $0x1b0] sm:$0xff]
    %v160 = vld [vmem:[#allocation2 + $0x1b8] sm:$0xff]
    %v161 = vld [vmem:[#allocation2 + $0x1c0] sm:$0xff]
    %v162 = vld [vmem:[#allocation2 + $0x1c8] sm:$0xff]
    %v163 = vld [vmem:[#allocation2 + $0x1d0] sm:$0xff]
    %v164 = vld [vmem:[#allocation2 + $0x1d8] sm:$0xff]
    %v165 = vld [vmem:[#allocation2 + $0x1e0] sm:$0xff]
    %v166 = vld [vmem:[#allocation2 + $0x1e8] sm:$0xff]
    %v167 = vld [vmem:[#allocation2 + $0x1f0] sm:$0xff]
    %v168 = vld [vmem:[#allocation2 + $0x1f8] sm:$0xff]
    %v169 = vld [vmem:[#allocation2 + $0x200] sm:$0xff]
    %v170 = vld [vmem:[#allocation2 + $0x208] sm:$0xff]
    %v171 = vld [vmem:[#allocation2 + $0x210] sm:$0xff]
    %v172 = vld [vmem:[#allocation2 + $0x218] sm:$0xff]
    %v173 = vld [vmem:[#allocation2 + $0x220] sm:$0xff]
    %v174 = vld [vmem:[#allocation2 + $0x228] sm:$0xff]
    %v175 = vld [vmem:[#allocation2 + $0x230] sm:$0xff]
    %v176 = vld [vmem:[#allocation2 + $0x238] sm:$0xff]
    %v177 = vld [vmem:[#allocation2 + $0x240] sm:$0xff]
    %v178 = vld [vmem:[#allocation2 + $0x248] sm:$0xff]
    %v179 = vld [vmem:[#allocation2 + $0x250] sm:$0xff]
    %v180 = vld [vmem:[#allocation2 + $0x258] sm:$0xff]
    %v181 = vld [vmem:[#allocation2 + $0x260] sm:$0xff]
    %v182 = vld [vmem:[#allocation2 + $0x268] sm:$0xff]
    %v183 = vld [vmem:[#allocation2 + $0x270] sm:$0xff]
    %v184 = vld [vmem:[#allocation2 + $0x278] sm:$0xff]
    %v185 = vld [vmem:[#allocation2 + $0x280] sm:$0xff]
    %v186 = vld [vmem:[#allocation2 + $0x288] sm:$0xff]
    %v187 = vld [vmem:[#allocation2 + $0x290] sm:$0xff]
    %v188 = vld [vmem:[#allocation2 + $0x298] sm:$0xff]
    %v189 = vld [vmem:[#allocation2 + $0x2a0] sm:$0xff]
    %v190 = vld [vmem:[#allocation2 + $0x2a8] sm:$0xff]
    %v191 = vld [vmem:[#allocation2 + $0x2b0] sm:$0xff]
    %v192 = vld [vmem:[#allocation2 + $0x2b8] sm:$0xff]
    %v193 = vld [vmem:[#allocation2 + $0x2c0] sm:$0xff]
    %v194 = vld [vmem:[#allocation2 + $0x2c8] sm:$0xff]
    %v195 = vld [vmem:[#allocation2 + $0x2d0] sm:$0xff]
    %v196 = vld [vmem:[#allocation2 + $0x2d8] sm:$0xff]
    %v197 = vld [vmem:[#allocation2 + $0x2e0] sm:$0xff]
    %v198 = vld [vmem:[#allocation2 + $0x2e8] sm:$0xff]
    %v199 = vld [vmem:[#allocation2 + $0x2f0] sm:$0xff]
    %v200 = vld [vmem:[#allocation2 + $0x2f8] sm:$0xff]
    %v201 = vld [vmem:[#allocation2 + $0x300] sm:$0xff]
    %v202 = vld [vmem:[#allocation2 + $0x308] sm:$0xff]
    %v203 = vld [vmem:[#allocation2 + $0x310] sm:$0xff]
    %v204 = vld [vmem:[#allocation2 + $0x318] sm:$0xff]
    %v205 = vld [vmem:[#allocation2 + $0x320] sm:$0xff]
    %v206 = vld [vmem:[#allocation2 + $0x328] sm:$0xff]
    %v207 = vld [vmem:[#allocation2 + $0x330] sm:$0xff]
    %v208 = vld [vmem:[#allocation2 + $0x338] sm:$0xff]
    %v209 = vld [vmem:[#allocation2 + $0x340] sm:$0xff]
    %v210 = vld [vmem:[#allocation2 + $0x348] sm:$0xff]
    %v211 = vld [vmem:[#allocation2 + $0x350] sm:$0xff]
    %v212 = vld [vmem:[#allocation2 + $0x358] sm:$0xff]
    %v213 = vld [vmem:[#allocation2 + $0x360] sm:$0xff]
    %v214 = vld [vmem:[#allocation2 + $0x368] sm:$0xff]
    %v215 = vld [vmem:[#allocation2 + $0x370] sm:$0xff]
    %v216 = vld [vmem:[#allocation2 + $0x378] sm:$0xff]
    %v217 = vld [vmem:[#allocation2 + $0x380] sm:$0xff]
    %v218 = vld [vmem:[#allocation2 + $0x388] sm:$0xff]
    %v219 = vld [vmem:[#allocation2 + $0x390] sm:$0xff]
    %v220 = vld [vmem:[#allocation2 + $0x398] sm:$0xff]
    %v221 = vld [vmem:[#allocation2 + $0x3a0] sm:$0xff]
    %v222 = vld [vmem:[#allocation2 + $0x3a8] sm:$0xff]
    %v223 = vld [vmem:[#allocation2 + $0x3b0] sm:$0xff]
    %v224 = vld [vmem:[#allocation2 + $0x3b8] sm:$0xff]
    %v225 = vld [vmem:[#allocation2 + $0x3c0] sm:$0xff]
    %v226 = vld [vmem:[#allocation2 + $0x3c8] sm:$0xff]
    %v227 = vld [vmem:[#allocation2 + $0x3d0] sm:$0xff]
    %v228 = vld [vmem:[#allocation2 + $0x3d8] sm:$0xff]
    %v229 = vld [vmem:[#allocation2 + $0x3e0] sm:$0xff]
    %v230 = vld [vmem:[#allocation2 + $0x3e8] sm:$0xff]
    %v231 = vld [vmem:[#allocation2 + $0x3f0] sm:$0xff]
    %v232 = vld [vmem:[#allocation2 + $0x3f8] sm:$0xff]
    %v233 = vld [vmem:[#allocation2 + $0x400] sm:$0xff]
    %v234 = vld [vmem:[#allocation2 + $0x408] sm:$0xff]
    %v235 = vld [vmem:[#allocation2 + $0x410] sm:$0xff]
    %v236 = vld [vmem:[#allocation2 + $0x418] sm:$0xff]
    %v237 = vld [vmem:[#allocation2 + $0x420] sm:$0xff]
    %v238 = vld [vmem:[#allocation2 + $0x428] sm:$0xff]
    %v239 = vld [vmem:[#allocation2 + $0x430] sm:$0xff]
    %v240 = vld [vmem:[#allocation2 + $0x438] sm:$0xff]
    %v241 = vld [vmem:[#allocation2 + $0x440] sm:$0xff]
    %v242 = vld [vmem:[#allocation2 + $0x448] sm:$0xff]
    %v243 = vld [vmem:[#allocation2 + $0x450] sm:$0xff]
    %v244 = vld [vmem:[#allocation2 + $0x458] sm:$0xff]
    %v245 = vld [vmem:[#allocation2 + $0x460] sm:$0xff]
    %v246 = vld [vmem:[#allocation2 + $0x468] sm:$0xff]
    %v247 = vld [vmem:[#allocation2 + $0x470] sm:$0xff]
    %v248 = vld [vmem:[#allocation2 + $0x478] sm:$0xff]
    %v249 = vld [vmem:[#allocation2 + $0x480] sm:$0xff]
    %v250 = vld [vmem:[#allocation2 + $0x488] sm:$0xff]
    %v251 = vld [vmem:[#allocation2 + $0x490] sm:$0xff]
    %v252 = vld [vmem:[#allocation2 + $0x498] sm:$0xff]
    %v253 = vld [vmem:[#allocation2 + $0x4a0] sm:$0xff]
    %v254 = vld [vmem:[#allocation2 + $0x4a8] sm:$0xff]
    %v255 = vld [vmem:[#allocation2 + $0x4b0] sm:$0xff]
    %v256 = vld [vmem:[#allocation2 + $0x4b8] sm:$0xff]
    %v257 = vld [vmem:[#allocation2 + $0x4c0] sm:$0xff]
    %v258 = vld [vmem:[#allocation2 + $0x4c8] sm:$0xff]
    %v259 = vld [vmem:[#allocation2 + $0x4d0] sm:$0xff]
    %v260 = vld [vmem:[#allocation2 + $0x4d8] sm:$0xff]
    %v261 = vld [vmem:[#allocation2 + $0x4e0] sm:$0xff]
    %v262 = vld [vmem:[#allocation2 + $0x4e8] sm:$0xff]
    %v263 = vld [vmem:[#allocation2 + $0x4f0] sm:$0xff]
    %v264 = vld [vmem:[#allocation2 + $0x4f8] sm:$0xff]
    %v265 = vld [vmem:[#allocation2 + $0x500] sm:$0xff]
    %v266 = vld [vmem:[#allocation2 + $0x508] sm:$0xff]
    %v267 = vld [vmem:[#allocation2 + $0x510] sm:$0xff]
    %v268 = vld [vmem:[#allocation2 + $0x518] sm:$0xff]
    %v269 = vld [vmem:[#allocation2 + $0x520] sm:$0xff]
    %v270 = vld [vmem:[#allocation2 + $0x528] sm:$0xff]
    %v271 = vld [vmem:[#allocation2 + $0x530] sm:$0xff]
    %v272 = vld [vmem:[#allocation2 + $0x538] sm:$0xff]
    %v273 = vld [vmem:[#allocation2 + $0x540] sm:$0xff]
    %v274 = vld [vmem:[#allocation2 + $0x548] sm:$0xff]
    %v275 = vld [vmem:[#allocation2 + $0x550] sm:$0xff]
    %v276 = vld [vmem:[#allocation2 + $0x558] sm:$0xff]
    %v277 = vld [vmem:[#allocation2 + $0x560] sm:$0xff]
    %v278 = vld [vmem:[#allocation2 + $0x568] sm:$0xff]
    %v279 = vld [vmem:[#allocation2 + $0x570] sm:$0xff]
    %v280 = vld [vmem:[#allocation2 + $0x578] sm:$0xff]
    %v281 = vld [vmem:[#allocation2 + $0x580] sm:$0xff]
    %v282 = vld [vmem:[#allocation2 + $0x588] sm:$0xff]
    %v283 = vld [vmem:[#allocation2 + $0x590] sm:$0xff]
    %v284 = vld [vmem:[#allocation2 + $0x598] sm:$0xff]
    %v285 = vld [vmem:[#allocation2 + $0x5a0] sm:$0xff]
    %v286 = vld [vmem:[#allocation2 + $0x5a8] sm:$0xff]
    %v287 = vld [vmem:[#allocation2 + $0x5b0] sm:$0xff]
    %v288 = vld [vmem:[#allocation2 + $0x5b8] sm:$0xff]
    %v289 = vld [vmem:[#allocation2 + $0x5c0] sm:$0xff]
    %v290 = vld [vmem:[#allocation2 + $0x5c8] sm:$0xff]
    %v291 = vld [vmem:[#allocation2 + $0x5d0] sm:$0xff]
    %v292 = vld [vmem:[#allocation2 + $0x5d8] sm:$0xff]
    %v293 = vld [vmem:[#allocation2 + $0x5e0] sm:$0xff]
    %v294 = vld [vmem:[#allocation2 + $0x5e8] sm:$0xff]
    %v295 = vld [vmem:[#allocation2 + $0x5f0] sm:$0xff]
    %v296 = vld [vmem:[#allocation2 + $0x5f8] sm:$0xff]
    %v297 = vld [vmem:[#allocation2 + $0x600] sm:$0xff]
    %v298 = vld [vmem:[#allocation2 + $0x608] sm:$0xff]
    %v299 = vld [vmem:[#allocation2 + $0x610] sm:$0xff]
    %v300 = vld [vmem:[#allocation2 + $0x618] sm:$0xff]
    %v301 = vld [vmem:[#allocation2 + $0x620] sm:$0xff]
    %v302 = vld [vmem:[#allocation2 + $0x628] sm:$0xff]
    %v303 = vld [vmem:[#allocation2 + $0x630] sm:$0xff]
    %v304 = vld [vmem:[#allocation2 + $0x638] sm:$0xff]
    %v305 = vld [vmem:[#allocation2 + $0x640] sm:$0xff]
    %v306 = vld [vmem:[#allocation2 + $0x648] sm:$0xff]
    %v307 = vld [vmem:[#allocation2 + $0x650] sm:$0xff]
    %v308 = vld [vmem:[#allocation2 + $0x658] sm:$0xff]
    %v309 = vld [vmem:[#allocation2 + $0x660] sm:$0xff]
    %v310 = vld [vmem:[#allocation2 + $0x668] sm:$0xff]
    %v311 = vld [vmem:[#allocation2 + $0x670] sm:$0xff]
    %v312 = vld [vmem:[#allocation2 + $0x678] sm:$0xff]
    %v313 = vld [vmem:[#allocation2 + $0x680] sm:$0xff]
    %v314 = vld [vmem:[#allocation2 + $0x688] sm:$0xff]
    %v315 = vld [vmem:[#allocation2 + $0x690] sm:$0xff]
    %v316 = vld [vmem:[#allocation2 + $0x698] sm:$0xff]
    %v317 = vld [vmem:[#allocation2 + $0x6a0] sm:$0xff]
    %v318 = vld [vmem:[#allocation2 + $0x6a8] sm:$0xff]
    %v319 = vld [vmem:[#allocation2 + $0x6b0] sm:$0xff]
    %v320 = vld [vmem:[#allocation2 + $0x6b8] sm:$0xff]
    %v321 = vld [vmem:[#allocation2 + $0x6c0] sm:$0xff]
    %v322 = vld [vmem:[#allocation2 + $0x6c8] sm:$0xff]
    %v323 = vld [vmem:[#allocation2 + $0x6d0] sm:$0xff]
    %v324 = vld [vmem:[#allocation2 + $0x6d8] sm:$0xff]
    %v325 = vld [vmem:[#allocation2 + $0x6e0] sm:$0xff]
    %v326 = vld [vmem:[#allocation2 + $0x6e8] sm:$0xff]
    %v327 = vld [vmem:[#allocation2 + $0x6f0] sm:$0xff]
    %v328 = vld [vmem:[#allocation2 + $0x6f8] sm:$0xff]
    %v329 = vld [vmem:[#allocation2 + $0x700] sm:$0xff]
    %v330 = vld [vmem:[#allocation2 + $0x708] sm:$0xff]
    %v331 = vld [vmem:[#allocation2 + $0x710] sm:$0xff]
    %v332 = vld [vmem:[#allocation2 + $0x718] sm:$0xff]
    %v333 = vld [vmem:[#allocation2 + $0x720] sm:$0xff]
    %v334 = vld [vmem:[#allocation2 + $0x728] sm:$0xff]
    %v335 = vld [vmem:[#allocation2 + $0x730] sm:$0xff]
    %v336 = vld [vmem:[#allocation2 + $0x738] sm:$0xff]
    %v337 = vld [vmem:[#allocation2 + $0x740] sm:$0xff]
    %v338 = vld [vmem:[#allocation2 + $0x748] sm:$0xff]
    %v339 = vld [vmem:[#allocation2 + $0x750] sm:$0xff]
    %v340 = vld [vmem:[#allocation2 + $0x758] sm:$0xff]
    %v341 = vld [vmem:[#allocation2 + $0x760] sm:$0xff]
    %v342 = vld [vmem:[#allocation2 + $0x768] sm:$0xff]
    %v343 = vld [vmem:[#allocation2 + $0x770] sm:$0xff]
    %v344 = vld [vmem:[#allocation2 + $0x778] sm:$0xff]
    %v345 = vld [vmem:[#allocation2 + $0x780] sm:$0xff]
    %v346 = vld [vmem:[#allocation2 + $0x788] sm:$0xff]
    %v347 = vld [vmem:[#allocation2 + $0x790] sm:$0xff]
    %v348 = vld [vmem:[#allocation2 + $0x798] sm:$0xff]
    %v349 = vld [vmem:[#allocation2 + $0x7a0] sm:$0xff]
    %v350 = vld [vmem:[#allocation2 + $0x7a8] sm:$0xff]
    %v351 = vld [vmem:[#allocation2 + $0x7b0] sm:$0xff]
    %v352 = vld [vmem:[#allocation2 + $0x7b8] sm:$0xff]
    %v353 = vld [vmem:[#allocation2 + $0x7c0] sm:$0xff]
    %v354 = vld [vmem:[#allocation2 + $0x7c8] sm:$0xff]
    %v355 = vld [vmem:[#allocation2 + $0x7d0] sm:$0xff]
    %v356 = vld [vmem:[#allocation2 + $0x7d8] sm:$0xff]
    %v357 = vld [vmem:[#allocation2 + $0x7e0] sm:$0xff]
    %v358 = vld [vmem:[#allocation2 + $0x7e8] sm:$0xff]
    %v359 = vld [vmem:[#allocation2 + $0x7f0] sm:$0xff]
    %v360 = vld [vmem:[#allocation2 + $0x7f8] sm:$0xff]
    %v361 = vlaneseq
    %v362 = vshrl.u32 %v361, 7
    %v363 = vsub.s32 0, %v362
    %v364 = vrot.slane %v85, %v363
    %v365 = vlaneseq
    %v366 = vshrl.u32 %v365, 7
    %v367 = vsub.s32 0, %v366
    %v368 = vrot.slane %v86, %v367
    %v369 = vlaneseq
    %v370 = vshrl.u32 %v369, 7
    %v371 = vsub.s32 0, %v370
    %v372 = vrot.slane %v87, %v371
    %v373 = vlaneseq
    %v374 = vshrl.u32 %v373, 7
    %v375 = vsub.s32 0, %v374
    %v376 = vrot.slane %v88, %v375
    %v633 = vunpack.c.l.b16 %v105
    %v634 = vunpack.c.h.b16 %v105
    %v635 = vunpack.c.l.b16 %v106
    %v636 = vunpack.c.h.b16 %v106
    %v637 = vunpack.c.l.b16 %v107
    %v638 = vunpack.c.h.b16 %v107
    %v639 = vunpack.c.l.b16 %v108
    %v640 = vunpack.c.h.b16 %v108
    %v641 = vunpack.c.l.b16 %v109
    %v642 = vunpack.c.h.b16 %v109
    %v643 = vunpack.c.l.b16 %v110
    %v644 = vunpack.c.h.b16 %v110
    %v645 = vunpack.c.l.b16 %v111
    %v646 = vunpack.c.h.b16 %v111
    %v647 = vunpack.c.l.b16 %v112
    %v648 = vunpack.c.h.b16 %v112
    %v649 = vunpack.c.l.b16 %v113
    %v650 = vunpack.c.h.b16 %v113
    %v651 = vunpack.c.l.b16 %v114
    %v652 = vunpack.c.h.b16 %v114
    %v653 = vunpack.c.l.b16 %v115
    %v654 = vunpack.c.h.b16 %v115
    %v655 = vunpack.c.l.b16 %v116
    %v656 = vunpack.c.h.b16 %v116
    %v657 = vunpack.c.l.b16 %v117
    %v658 = vunpack.c.h.b16 %v117
    %v659 = vunpack.c.l.b16 %v118
    %v660 = vunpack.c.h.b16 %v118
    %v661 = vunpack.c.l.b16 %v119
    %v662 = vunpack.c.h.b16 %v119
    %v663 = vunpack.c.l.b16 %v120
    %v664 = vunpack.c.h.b16 %v120
    %v665 = vunpack.c.l.b16 %v121
    %v666 = vunpack.c.h.b16 %v121
    %v667 = vunpack.c.l.b16 %v122
    %v668 = vunpack.c.h.b16 %v122
    %v669 = vunpack.c.l.b16 %v123
    %v670 = vunpack.c.h.b16 %v123
    %v671 = vunpack.c.l.b16 %v124
    %v672 = vunpack.c.h.b16 %v124
    %v673 = vunpack.c.l.b16 %v125
    %v674 = vunpack.c.h.b16 %v125
    %v675 = vunpack.c.l.b16 %v126
    %v676 = vunpack.c.h.b16 %v126
    %v677 = vunpack.c.l.b16 %v127
    %v678 = vunpack.c.h.b16 %v127
    %v679 = vunpack.c.l.b16 %v128
    %v680 = vunpack.c.h.b16 %v128
    %v681 = vunpack.c.l.b16 %v129
    %v682 = vunpack.c.h.b16 %v129
    %v683 = vunpack.c.l.b16 %v130
    %v684 = vunpack.c.h.b16 %v130
    %v685 = vunpack.c.l.b16 %v131
    %v686 = vunpack.c.h.b16 %v131
    %v687 = vunpack.c.l.b16 %v132
    %v688 = vunpack.c.h.b16 %v132
    %v689 = vunpack.c.l.b16 %v133
    %v690 = vunpack.c.h.b16 %v133
    %v691 = vunpack.c.l.b16 %v134
    %v692 = vunpack.c.h.b16 %v134
    %v693 = vunpack.c.l.b16 %v135
    %v694 = vunpack.c.h.b16 %v135
    %v695 = vunpack.c.l.b16 %v136
    %v696 = vunpack.c.h.b16 %v136
    %v697 = vunpack.c.l.b16 %v137
    %v698 = vunpack.c.h.b16 %v137
    %v699 = vunpack.c.l.b16 %v138
    %v700 = vunpack.c.h.b16 %v138
    %v701 = vunpack.c.l.b16 %v139
    %v702 = vunpack.c.h.b16 %v139
    %v703 = vunpack.c.l.b16 %v140
    %v704 = vunpack.c.h.b16 %v140
    %v705 = vunpack.c.l.b16 %v141
    %v706 = vunpack.c.h.b16 %v141
    %v707 = vunpack.c.l.b16 %v142
    %v708 = vunpack.c.h.b16 %v142
    %v709 = vunpack.c.l.b16 %v143
    %v710 = vunpack.c.h.b16 %v143
    %v711 = vunpack.c.l.b16 %v144
    %v712 = vunpack.c.h.b16 %v144
    %v713 = vunpack.c.l.b16 %v145
    %v714 = vunpack.c.h.b16 %v145
    %v715 = vunpack.c.l.b16 %v146
    %v716 = vunpack.c.h.b16 %v146
    %v717 = vunpack.c.l.b16 %v147
    %v718 = vunpack.c.h.b16 %v147
    %v719 = vunpack.c.l.b16 %v148
    %v720 = vunpack.c.h.b16 %v148
    %v721 = vunpack.c.l.b16 %v149
    %v722 = vunpack.c.h.b16 %v149
    %v723 = vunpack.c.l.b16 %v150
    %v724 = vunpack.c.h.b16 %v150
    %v725 = vunpack.c.l.b16 %v151
    %v726 = vunpack.c.h.b16 %v151
    %v727 = vunpack.c.l.b16 %v152
    %v728 = vunpack.c.h.b16 %v152
    %v729 = vunpack.c.l.b16 %v153
    %v730 = vunpack.c.h.b16 %v153
    %v731 = vunpack.c.l.b16 %v154
    %v732 = vunpack.c.h.b16 %v154
    %v733 = vunpack.c.l.b16 %v155
    %v734 = vunpack.c.h.b16 %v155
    %v735 = vunpack.c.l.b16 %v156
    %v736 = vunpack.c.h.b16 %v156
    %v737 = vunpack.c.l.b16 %v157
    %v738 = vunpack.c.h.b16 %v157
    %v739 = vunpack.c.l.b16 %v158
    %v740 = vunpack.c.h.b16 %v158
    %v741 = vunpack.c.l.b16 %v159
    %v742 = vunpack.c.h.b16 %v159
    %v743 = vunpack.c.l.b16 %v160
    %v744 = vunpack.c.h.b16 %v160
    %v745 = vunpack.c.l.b16 %v161
    %v746 = vunpack.c.h.b16 %v161
    %v747 = vunpack.c.l.b16 %v162
    %v748 = vunpack.c.h.b16 %v162
    %v749 = vunpack.c.l.b16 %v163
    %v750 = vunpack.c.h.b16 %v163
    %v751 = vunpack.c.l.b16 %v164
    %v752 = vunpack.c.h.b16 %v164
    %v753 = vunpack.c.l.b16 %v165
    %v754 = vunpack.c.h.b16 %v165
    %v755 = vunpack.c.l.b16 %v166
    %v756 = vunpack.c.h.b16 %v166
    %v757 = vunpack.c.l.b16 %v167
    %v758 = vunpack.c.h.b16 %v167
    %v759 = vunpack.c.l.b16 %v168
    %v760 = vunpack.c.h.b16 %v168
    %v761 = vunpack.c.l.b16 %v169
    %v762 = vunpack.c.h.b16 %v169
    %v763 = vunpack.c.l.b16 %v170
    %v764 = vunpack.c.h.b16 %v170
    %v765 = vunpack.c.l.b16 %v171
    %v766 = vunpack.c.h.b16 %v171
    %v767 = vunpack.c.l.b16 %v172
    %v768 = vunpack.c.h.b16 %v172
    %v769 = vunpack.c.l.b16 %v173
    %v770 = vunpack.c.h.b16 %v173
    %v771 = vunpack.c.l.b16 %v174
    %v772 = vunpack.c.h.b16 %v174
    %v773 = vunpack.c.l.b16 %v175
    %v774 = vunpack.c.h.b16 %v175
    %v775 = vunpack.c.l.b16 %v176
    %v776 = vunpack.c.h.b16 %v176
    %v777 = vunpack.c.l.b16 %v177
    %v778 = vunpack.c.h.b16 %v177
    %v779 = vunpack.c.l.b16 %v178
    %v780 = vunpack.c.h.b16 %v178
    %v781 = vunpack.c.l.b16 %v179
    %v782 = vunpack.c.h.b16 %v179
    %v783 = vunpack.c.l.b16 %v180
    %v784 = vunpack.c.h.b16 %v180
    %v785 = vunpack.c.l.b16 %v181
    %v786 = vunpack.c.h.b16 %v181
    %v787 = vunpack.c.l.b16 %v182
    %v788 = vunpack.c.h.b16 %v182
    %v789 = vunpack.c.l.b16 %v183
    %v790 = vunpack.c.h.b16 %v183
    %v791 = vunpack.c.l.b16 %v184
    %v792 = vunpack.c.h.b16 %v184
    %v793 = vunpack.c.l.b16 %v185
    %v794 = vunpack.c.h.b16 %v185
    %v795 = vunpack.c.l.b16 %v186
    %v796 = vunpack.c.h.b16 %v186
    %v797 = vunpack.c.l.b16 %v187
    %v798 = vunpack.c.h.b16 %v187
    %v799 = vunpack.c.l.b16 %v188
    %v800 = vunpack.c.h.b16 %v188
    %v801 = vunpack.c.l.b16 %v189
    %v802 = vunpack.c.h.b16 %v189
    %v803 = vunpack.c.l.b16 %v190
    %v804 = vunpack.c.h.b16 %v190
    %v805 = vunpack.c.l.b16 %v191
    %v806 = vunpack.c.h.b16 %v191
    %v807 = vunpack.c.l.b16 %v192
    %v808 = vunpack.c.h.b16 %v192
    %v809 = vunpack.c.l.b16 %v193
    %v810 = vunpack.c.h.b16 %v193
    %v811 = vunpack.c.l.b16 %v194
    %v812 = vunpack.c.h.b16 %v194
    %v813 = vunpack.c.l.b16 %v195
    %v814 = vunpack.c.h.b16 %v195
    %v815 = vunpack.c.l.b16 %v196
    %v816 = vunpack.c.h.b16 %v196
    %v817 = vunpack.c.l.b16 %v197
    %v818 = vunpack.c.h.b16 %v197
    %v819 = vunpack.c.l.b16 %v198
    %v820 = vunpack.c.h.b16 %v198
    %v821 = vunpack.c.l.b16 %v199
    %v822 = vunpack.c.h.b16 %v199
    %v823 = vunpack.c.l.b16 %v200
    %v824 = vunpack.c.h.b16 %v200
    %v825 = vunpack.c.l.b16 %v201
    %v826 = vunpack.c.h.b16 %v201
    %v827 = vunpack.c.l.b16 %v202
    %v828 = vunpack.c.h.b16 %v202
    %v829 = vunpack.c.l.b16 %v203
    %v830 = vunpack.c.h.b16 %v203
    %v831 = vunpack.c.l.b16 %v204
    %v832 = vunpack.c.h.b16 %v204
    %v833 = vunpack.c.l.b16 %v205
    %v834 = vunpack.c.h.b16 %v205
    %v835 = vunpack.c.l.b16 %v206
    %v836 = vunpack.c.h.b16 %v206
    %v837 = vunpack.c.l.b16 %v207
    %v838 = vunpack.c.h.b16 %v207
    %v839 = vunpack.c.l.b16 %v208
    %v840 = vunpack.c.h.b16 %v208
    %v841 = vunpack.c.l.b16 %v209
    %v842 = vunpack.c.h.b16 %v209
    %v843 = vunpack.c.l.b16 %v210
    %v844 = vunpack.c.h.b16 %v210
    %v845 = vunpack.c.l.b16 %v211
    %v846 = vunpack.c.h.b16 %v211
    %v847 = vunpack.c.l.b16 %v212
    %v848 = vunpack.c.h.b16 %v212
    %v849 = vunpack.c.l.b16 %v213
    %v850 = vunpack.c.h.b16 %v213
    %v851 = vunpack.c.l.b16 %v214
    %v852 = vunpack.c.h.b16 %v214
    %v853 = vunpack.c.l.b16 %v215
    %v854 = vunpack.c.h.b16 %v215
    %v855 = vunpack.c.l.b16 %v216
    %v856 = vunpack.c.h.b16 %v216
    %v857 = vunpack.c.l.b16 %v217
    %v858 = vunpack.c.h.b16 %v217
    %v859 = vunpack.c.l.b16 %v218
    %v860 = vunpack.c.h.b16 %v218
    %v861 = vunpack.c.l.b16 %v219
    %v862 = vunpack.c.h.b16 %v219
    %v863 = vunpack.c.l.b16 %v220
    %v864 = vunpack.c.h.b16 %v220
    %v865 = vunpack.c.l.b16 %v221
    %v866 = vunpack.c.h.b16 %v221
    %v867 = vunpack.c.l.b16 %v222
    %v868 = vunpack.c.h.b16 %v222
    %v869 = vunpack.c.l.b16 %v223
    %v870 = vunpack.c.h.b16 %v223
    %v871 = vunpack.c.l.b16 %v224
    %v872 = vunpack.c.h.b16 %v224
    %v873 = vunpack.c.l.b16 %v225
    %v874 = vunpack.c.h.b16 %v225
    %v875 = vunpack.c.l.b16 %v226
    %v876 = vunpack.c.h.b16 %v226
    %v877 = vunpack.c.l.b16 %v227
    %v878 = vunpack.c.h.b16 %v227
    %v879 = vunpack.c.l.b16 %v228
    %v880 = vunpack.c.h.b16 %v228
    %v881 = vunpack.c.l.b16 %v229
    %v882 = vunpack.c.h.b16 %v229
    %v883 = vunpack.c.l.b16 %v230
    %v884 = vunpack.c.h.b16 %v230
    %v885 = vunpack.c.l.b16 %v231
    %v886 = vunpack.c.h.b16 %v231
    %v887 = vunpack.c.l.b16 %v232
    %v888 = vunpack.c.h.b16 %v232
    %v889 = vunpack.c.l.b16 %v233
    %v890 = vunpack.c.h.b16 %v233
    %v891 = vunpack.c.l.b16 %v234
    %v892 = vunpack.c.h.b16 %v234
    %v893 = vunpack.c.l.b16 %v235
    %v894 = vunpack.c.h.b16 %v235
    %v895 = vunpack.c.l.b16 %v236
    %v896 = vunpack.c.h.b16 %v236
    %v897 = vunpack.c.l.b16 %v237
    %v898 = vunpack.c.h.b16 %v237
    %v899 = vunpack.c.l.b16 %v238
    %v900 = vunpack.c.h.b16 %v238
    %v901 = vunpack.c.l.b16 %v239
    %v902 = vunpack.c.h.b16 %v239
    %v903 = vunpack.c.l.b16 %v240
    %v904 = vunpack.c.h.b16 %v240
    %v905 = vunpack.c.l.b16 %v241
    %v906 = vunpack.c.h.b16 %v241
    %v907 = vunpack.c.l.b16 %v242
    %v908 = vunpack.c.h.b16 %v242
    %v909 = vunpack.c.l.b16 %v243
    %v910 = vunpack.c.h.b16 %v243
    %v911 = vunpack.c.l.b16 %v244
    %v912 = vunpack.c.h.b16 %v244
    %v913 = vunpack.c.l.b16 %v245
    %v914 = vunpack.c.h.b16 %v245
    %v915 = vunpack.c.l.b16 %v246
    %v916 = vunpack.c.h.b16 %v246
    %v917 = vunpack.c.l.b16 %v247
    %v918 = vunpack.c.h.b16 %v247
    %v919 = vunpack.c.l.b16 %v248
    %v920 = vunpack.c.h.b16 %v248
    %v921 = vunpack.c.l.b16 %v249
    %v922 = vunpack.c.h.b16 %v249
    %v923 = vunpack.c.l.b16 %v250
    %v924 = vunpack.c.h.b16 %v250
    %v925 = vunpack.c.l.b16 %v251
    %v926 = vunpack.c.h.b16 %v251
    %v927 = vunpack.c.l.b16 %v252
    %v928 = vunpack.c.h.b16 %v252
    %v929 = vunpack.c.l.b16 %v253
    %v930 = vunpack.c.h.b16 %v253
    %v931 = vunpack.c.l.b16 %v254
    %v932 = vunpack.c.h.b16 %v254
    %v933 = vunpack.c.l.b16 %v255
    %v934 = vunpack.c.h.b16 %v255
    %v935 = vunpack.c.l.b16 %v256
    %v936 = vunpack.c.h.b16 %v256
    %v937 = vunpack.c.l.b16 %v257
    %v938 = vunpack.c.h.b16 %v257
    %v939 = vunpack.c.l.b16 %v258
    %v940 = vunpack.c.h.b16 %v258
    %v941 = vunpack.c.l.b16 %v259
    %v942 = vunpack.c.h.b16 %v259
    %v943 = vunpack.c.l.b16 %v260
    %v944 = vunpack.c.h.b16 %v260
    %v945 = vunpack.c.l.b16 %v261
    %v946 = vunpack.c.h.b16 %v261
    %v947 = vunpack.c.l.b16 %v262
    %v948 = vunpack.c.h.b16 %v262
    %v949 = vunpack.c.l.b16 %v263
    %v950 = vunpack.c.h.b16 %v263
    %v951 = vunpack.c.l.b16 %v264
    %v952 = vunpack.c.h.b16 %v264
    %v953 = vunpack.c.l.b16 %v265
    %v954 = vunpack.c.h.b16 %v265
    %v955 = vunpack.c.l.b16 %v266
    %v956 = vunpack.c.h.b16 %v266
    %v957 = vunpack.c.l.b16 %v267
    %v958 = vunpack.c.h.b16 %v267
    %v959 = vunpack.c.l.b16 %v268
    %v960 = vunpack.c.h.b16 %v268
    %v961 = vunpack.c.l.b16 %v269
    %v962 = vunpack.c.h.b16 %v269
    %v963 = vunpack.c.l.b16 %v270
    %v964 = vunpack.c.h.b16 %v270
    %v965 = vunpack.c.l.b16 %v271
    %v966 = vunpack.c.h.b16 %v271
    %v967 = vunpack.c.l.b16 %v272
    %v968 = vunpack.c.h.b16 %v272
    %v969 = vunpack.c.l.b16 %v273
    %v970 = vunpack.c.h.b16 %v273
    %v971 = vunpack.c.l.b16 %v274
    %v972 = vunpack.c.h.b16 %v274
    %v973 = vunpack.c.l.b16 %v275
    %v974 = vunpack.c.h.b16 %v275
    %v975 = vunpack.c.l.b16 %v276
    %v976 = vunpack.c.h.b16 %v276
    %v977 = vunpack.c.l.b16 %v277
    %v978 = vunpack.c.h.b16 %v277
    %v979 = vunpack.c.l.b16 %v278
    %v980 = vunpack.c.h.b16 %v278
    %v981 = vunpack.c.l.b16 %v279
    %v982 = vunpack.c.h.b16 %v279
    %v983 = vunpack.c.l.b16 %v280
    %v984 = vunpack.c.h.b16 %v280
    %v985 = vunpack.c.l.b16 %v281
    %v986 = vunpack.c.h.b16 %v281
    %v987 = vunpack.c.l.b16 %v282
    %v988 = vunpack.c.h.b16 %v282
    %v989 = vunpack.c.l.b16 %v283
    %v990 = vunpack.c.h.b16 %v283
    %v991 = vunpack.c.l.b16 %v284
    %v992 = vunpack.c.h.b16 %v284
    %v993 = vunpack.c.l.b16 %v285
    %v994 = vunpack.c.h.b16 %v285
    %v995 = vunpack.c.l.b16 %v286
    %v996 = vunpack.c.h.b16 %v286
    %v997 = vunpack.c.l.b16 %v287
    %v998 = vunpack.c.h.b16 %v287
    %v999 = vunpack.c.l.b16 %v288
    %v1000 = vunpack.c.h.b16 %v288
    %v1001 = vunpack.c.l.b16 %v289
    %v1002 = vunpack.c.h.b16 %v289
    %v1003 = vunpack.c.l.b16 %v290
    %v1004 = vunpack.c.h.b16 %v290
    %v1005 = vunpack.c.l.b16 %v291
    %v1006 = vunpack.c.h.b16 %v291
    %v1007 = vunpack.c.l.b16 %v292
    %v1008 = vunpack.c.h.b16 %v292
    %v1009 = vunpack.c.l.b16 %v293
    %v1010 = vunpack.c.h.b16 %v293
    %v1011 = vunpack.c.l.b16 %v294
    %v1012 = vunpack.c.h.b16 %v294
    %v1013 = vunpack.c.l.b16 %v295
    %v1014 = vunpack.c.h.b16 %v295
    %v1015 = vunpack.c.l.b16 %v296
    %v1016 = vunpack.c.h.b16 %v296
    %v1017 = vunpack.c.l.b16 %v297
    %v1018 = vunpack.c.h.b16 %v297
    %v1019 = vunpack.c.l.b16 %v298
    %v1020 = vunpack.c.h.b16 %v298
    %v1021 = vunpack.c.l.b16 %v299
    %v1022 = vunpack.c.h.b16 %v299
    %v1023 = vunpack.c.l.b16 %v300
    %v1024 = vunpack.c.h.b16 %v300
    %v1025 = vunpack.c.l.b16 %v301
    %v1026 = vunpack.c.h.b16 %v301
    %v1027 = vunpack.c.l.b16 %v302
    %v1028 = vunpack.c.h.b16 %v302
    %v1029 = vunpack.c.l.b16 %v303
    %v1030 = vunpack.c.h.b16 %v303
    %v1031 = vunpack.c.l.b16 %v304
    %v1032 = vunpack.c.h.b16 %v304
    %v1033 = vunpack.c.l.b16 %v305
    %v1034 = vunpack.c.h.b16 %v305
    %v1035 = vunpack.c.l.b16 %v306
    %v1036 = vunpack.c.h.b16 %v306
    %v1037 = vunpack.c.l.b16 %v307
    %v1038 = vunpack.c.h.b16 %v307
    %v1039 = vunpack.c.l.b16 %v308
    %v1040 = vunpack.c.h.b16 %v308
    %v1041 = vunpack.c.l.b16 %v309
    %v1042 = vunpack.c.h.b16 %v309
    %v1043 = vunpack.c.l.b16 %v310
    %v1044 = vunpack.c.h.b16 %v310
    %v1045 = vunpack.c.l.b16 %v311
    %v1046 = vunpack.c.h.b16 %v311
    %v1047 = vunpack.c.l.b16 %v312
    %v1048 = vunpack.c.h.b16 %v312
    %v1049 = vunpack.c.l.b16 %v313
    %v1050 = vunpack.c.h.b16 %v313
    %v1051 = vunpack.c.l.b16 %v314
    %v1052 = vunpack.c.h.b16 %v314
    %v1053 = vunpack.c.l.b16 %v315
    %v1054 = vunpack.c.h.b16 %v315
    %v1055 = vunpack.c.l.b16 %v316
    %v1056 = vunpack.c.h.b16 %v316
    %v1057 = vunpack.c.l.b16 %v317
    %v1058 = vunpack.c.h.b16 %v317
    %v1059 = vunpack.c.l.b16 %v318
    %v1060 = vunpack.c.h.b16 %v318
    %v1061 = vunpack.c.l.b16 %v319
    %v1062 = vunpack.c.h.b16 %v319
    %v1063 = vunpack.c.l.b16 %v320
    %v1064 = vunpack.c.h.b16 %v320
    %v1065 = vunpack.c.l.b16 %v321
    %v1066 = vunpack.c.h.b16 %v321
    %v1067 = vunpack.c.l.b16 %v322
    %v1068 = vunpack.c.h.b16 %v322
    %v1069 = vunpack.c.l.b16 %v323
    %v1070 = vunpack.c.h.b16 %v323
    %v1071 = vunpack.c.l.b16 %v324
    %v1072 = vunpack.c.h.b16 %v324
    %v1073 = vunpack.c.l.b16 %v325
    %v1074 = vunpack.c.h.b16 %v325
    %v1075 = vunpack.c.l.b16 %v326
    %v1076 = vunpack.c.h.b16 %v326
    %v1077 = vunpack.c.l.b16 %v327
    %v1078 = vunpack.c.h.b16 %v327
    %v1079 = vunpack.c.l.b16 %v328
    %v1080 = vunpack.c.h.b16 %v328
    %v1081 = vunpack.c.l.b16 %v329
    %v1082 = vunpack.c.h.b16 %v329
    %v1083 = vunpack.c.l.b16 %v330
    %v1084 = vunpack.c.h.b16 %v330
    %v1085 = vunpack.c.l.b16 %v331
    %v1086 = vunpack.c.h.b16 %v331
    %v1087 = vunpack.c.l.b16 %v332
    %v1088 = vunpack.c.h.b16 %v332
    %v1089 = vunpack.c.l.b16 %v333
    %v1090 = vunpack.c.h.b16 %v333
    %v1091 = vunpack.c.l.b16 %v334
    %v1092 = vunpack.c.h.b16 %v334
    %v1093 = vunpack.c.l.b16 %v335
    %v1094 = vunpack.c.h.b16 %v335
    %v1095 = vunpack.c.l.b16 %v336
    %v1096 = vunpack.c.h.b16 %v336
    %v1097 = vunpack.c.l.b16 %v337
    %v1098 = vunpack.c.h.b16 %v337
    %v1099 = vunpack.c.l.b16 %v338
    %v1100 = vunpack.c.h.b16 %v338
    %v1101 = vunpack.c.l.b16 %v339
    %v1102 = vunpack.c.h.b16 %v339
    %v1103 = vunpack.c.l.b16 %v340
    %v1104 = vunpack.c.h.b16 %v340
    %v1105 = vunpack.c.l.b16 %v341
    %v1106 = vunpack.c.h.b16 %v341
    %v1107 = vunpack.c.l.b16 %v342
    %v1108 = vunpack.c.h.b16 %v342
    %v1109 = vunpack.c.l.b16 %v343
    %v1110 = vunpack.c.h.b16 %v343
    %v1111 = vunpack.c.l.b16 %v344
    %v1112 = vunpack.c.h.b16 %v344
    %v1113 = vunpack.c.l.b16 %v345
    %v1114 = vunpack.c.h.b16 %v345
    %v1115 = vunpack.c.l.b16 %v346
    %v1116 = vunpack.c.h.b16 %v346
    %v1117 = vunpack.c.l.b16 %v347
    %v1118 = vunpack.c.h.b16 %v347
    %v1119 = vunpack.c.l.b16 %v348
    %v1120 = vunpack.c.h.b16 %v348
    %v1121 = vunpack.c.l.b16 %v349
    %v1122 = vunpack.c.h.b16 %v349
    %v1123 = vunpack.c.l.b16 %v350
    %v1124 = vunpack.c.h.b16 %v350
    %v1125 = vunpack.c.l.b16 %v351
    %v1126 = vunpack.c.h.b16 %v351
    %v1127 = vunpack.c.l.b16 %v352
    %v1128 = vunpack.c.h.b16 %v352
    %v1129 = vunpack.c.l.b16 %v353
    %v1130 = vunpack.c.h.b16 %v353
    %v1131 = vunpack.c.l.b16 %v354
    %v1132 = vunpack.c.h.b16 %v354
    %v1133 = vunpack.c.l.b16 %v355
    %v1134 = vunpack.c.h.b16 %v355
    %v1135 = vunpack.c.l.b16 %v356
    %v1136 = vunpack.c.h.b16 %v356
    %v1137 = vunpack.c.l.b16 %v357
    %v1138 = vunpack.c.h.b16 %v357
    %v1139 = vunpack.c.l.b16 %v358
    %v1140 = vunpack.c.h.b16 %v358
    %v1141 = vunpack.c.l.b16 %v359
    %v1142 = vunpack.c.h.b16 %v359
    %v1143 = vunpack.c.l.b16 %v360
    %v1144 = vunpack.c.h.b16 %v360
    %v1145 = vpack.c.b16 %v637, %v633
    %v1146 = vpack.c.b16 %v638, %v634
    %v1147 = vpack.c.b16 %v639, %v635
    %v1148 = vpack.c.b16 %v640, %v636
    %v1149 = vpack.c.b16 %v645, %v641
    %v1150 = vpack.c.b16 %v646, %v642
    %v1151 = vpack.c.b16 %v647, %v643
    %v1152 = vpack.c.b16 %v648, %v644
    %v1153 = vpack.c.b16 %v653, %v649
    %v1154 = vpack.c.b16 %v654, %v650
    %v1155 = vpack.c.b16 %v655, %v651
    %v1156 = vpack.c.b16 %v656, %v652
    %v1157 = vpack.c.b16 %v661, %v657
    %v1158 = vpack.c.b16 %v662, %v658
    %v1159 = vpack.c.b16 %v663, %v659
    %v1160 = vpack.c.b16 %v664, %v660
    %v1161 = vpack.c.b16 %v669, %v665
    %v1162 = vpack.c.b16 %v670, %v666
    %v1163 = vpack.c.b16 %v671, %v667
    %v1164 = vpack.c.b16 %v672, %v668
    %v1165 = vpack.c.b16 %v677, %v673
    %v1166 = vpack.c.b16 %v678, %v674
    %v1167 = vpack.c.b16 %v679, %v675
    %v1168 = vpack.c.b16 %v680, %v676
    %v1169 = vpack.c.b16 %v685, %v681
    %v1170 = vpack.c.b16 %v686, %v682
    %v1171 = vpack.c.b16 %v687, %v683
    %v1172 = vpack.c.b16 %v688, %v684
    %v1173 = vpack.c.b16 %v693, %v689
    %v1174 = vpack.c.b16 %v694, %v690
    %v1175 = vpack.c.b16 %v695, %v691
    %v1176 = vpack.c.b16 %v696, %v692
    %v1177 = vpack.c.b16 %v701, %v697
    %v1178 = vpack.c.b16 %v702, %v698
    %v1179 = vpack.c.b16 %v703, %v699
    %v1180 = vpack.c.b16 %v704, %v700
    %v1181 = vpack.c.b16 %v709, %v705
    %v1182 = vpack.c.b16 %v710, %v706
    %v1183 = vpack.c.b16 %v711, %v707
    %v1184 = vpack.c.b16 %v712, %v708
    %v1185 = vpack.c.b16 %v717, %v713
    %v1186 = vpack.c.b16 %v718, %v714
    %v1187 = vpack.c.b16 %v719, %v715
    %v1188 = vpack.c.b16 %v720, %v716
    %v1189 = vpack.c.b16 %v725, %v721
    %v1190 = vpack.c.b16 %v726, %v722
    %v1191 = vpack.c.b16 %v727, %v723
    %v1192 = vpack.c.b16 %v728, %v724
    %v1193 = vpack.c.b16 %v733, %v729
    %v1194 = vpack.c.b16 %v734, %v730
    %v1195 = vpack.c.b16 %v735, %v731
    %v1196 = vpack.c.b16 %v736, %v732
    %v1197 = vpack.c.b16 %v741, %v737
    %v1198 = vpack.c.b16 %v742, %v738
    %v1199 = vpack.c.b16 %v743, %v739
    %v1200 = vpack.c.b16 %v744, %v740
    %v1201 = vpack.c.b16 %v749, %v745
    %v1202 = vpack.c.b16 %v750, %v746
    %v1203 = vpack.c.b16 %v751, %v747
    %v1204 = vpack.c.b16 %v752, %v748
    %v1205 = vpack.c.b16 %v757, %v753
    %v1206 = vpack.c.b16 %v758, %v754
    %v1207 = vpack.c.b16 %v759, %v755
    %v1208 = vpack.c.b16 %v760, %v756
    %v1209 = vpack.c.b16 %v765, %v761
    %v1210 = vpack.c.b16 %v766, %v762
    %v1211 = vpack.c.b16 %v767, %v763
    %v1212 = vpack.c.b16 %v768, %v764
    %v1213 = vpack.c.b16 %v773, %v769
    %v1214 = vpack.c.b16 %v774, %v770
    %v1215 = vpack.c.b16 %v775, %v771
    %v1216 = vpack.c.b16 %v776, %v772
    %v1217 = vpack.c.b16 %v781, %v777
    %v1218 = vpack.c.b16 %v782, %v778
    %v1219 = vpack.c.b16 %v783, %v779
    %v1220 = vpack.c.b16 %v784, %v780
    %v1221 = vpack.c.b16 %v789, %v785
    %v1222 = vpack.c.b16 %v790, %v786
    %v1223 = vpack.c.b16 %v791, %v787
    %v1224 = vpack.c.b16 %v792, %v788
    %v1225 = vpack.c.b16 %v797, %v793
    %v1226 = vpack.c.b16 %v798, %v794
    %v1227 = vpack.c.b16 %v799, %v795
    %v1228 = vpack.c.b16 %v800, %v796
    %v1229 = vpack.c.b16 %v805, %v801
    %v1230 = vpack.c.b16 %v806, %v802
    %v1231 = vpack.c.b16 %v807, %v803
    %v1232 = vpack.c.b16 %v808, %v804
    %v1233 = vpack.c.b16 %v813, %v809
    %v1234 = vpack.c.b16 %v814, %v810
    %v1235 = vpack.c.b16 %v815, %v811
    %v1236 = vpack.c.b16 %v816, %v812
    %v1237 = vpack.c.b16 %v821, %v817
    %v1238 = vpack.c.b16 %v822, %v818
    %v1239 = vpack.c.b16 %v823, %v819
    %v1240 = vpack.c.b16 %v824, %v820
    %v1241 = vpack.c.b16 %v829, %v825
    %v1242 = vpack.c.b16 %v830, %v826
    %v1243 = vpack.c.b16 %v831, %v827
    %v1244 = vpack.c.b16 %v832, %v828
    %v1245 = vpack.c.b16 %v837, %v833
    %v1246 = vpack.c.b16 %v838, %v834
    %v1247 = vpack.c.b16 %v839, %v835
    %v1248 = vpack.c.b16 %v840, %v836
    %v1249 = vpack.c.b16 %v845, %v841
    %v1250 = vpack.c.b16 %v846, %v842
    %v1251 = vpack.c.b16 %v847, %v843
    %v1252 = vpack.c.b16 %v848, %v844
    %v1253 = vpack.c.b16 %v853, %v849
    %v1254 = vpack.c.b16 %v854, %v850
    %v1255 = vpack.c.b16 %v855, %v851
    %v1256 = vpack.c.b16 %v856, %v852
    %v1257 = vpack.c.b16 %v861, %v857
    %v1258 = vpack.c.b16 %v862, %v858
    %v1259 = vpack.c.b16 %v863, %v859
    %v1260 = vpack.c.b16 %v864, %v860
    %v1261 = vpack.c.b16 %v869, %v865
    %v1262 = vpack.c.b16 %v870, %v866
    %v1263 = vpack.c.b16 %v871, %v867
    %v1264 = vpack.c.b16 %v872, %v868
    %v1265 = vpack.c.b16 %v877, %v873
    %v1266 = vpack.c.b16 %v878, %v874
    %v1267 = vpack.c.b16 %v879, %v875
    %v1268 = vpack.c.b16 %v880, %v876
    %v1269 = vpack.c.b16 %v885, %v881
    %v1270 = vpack.c.b16 %v886, %v882
    %v1271 = vpack.c.b16 %v887, %v883
    %v1272 = vpack.c.b16 %v888, %v884
    %v1273 = vpack.c.b16 %v893, %v889
    %v1274 = vpack.c.b16 %v894, %v890
    %v1275 = vpack.c.b16 %v895, %v891
    %v1276 = vpack.c.b16 %v896, %v892
    %v1277 = vpack.c.b16 %v901, %v897
    %v1278 = vpack.c.b16 %v902, %v898
    %v1279 = vpack.c.b16 %v903, %v899
    %v1280 = vpack.c.b16 %v904, %v900
    %v1281 = vpack.c.b16 %v909, %v905
    %v1282 = vpack.c.b16 %v910, %v906
    %v1283 = vpack.c.b16 %v911, %v907
    %v1284 = vpack.c.b16 %v912, %v908
    %v1285 = vpack.c.b16 %v917, %v913
    %v1286 = vpack.c.b16 %v918, %v914
    %v1287 = vpack.c.b16 %v919, %v915
    %v1288 = vpack.c.b16 %v920, %v916
    %v1289 = vpack.c.b16 %v925, %v921
    %v1290 = vpack.c.b16 %v926, %v922
    %v1291 = vpack.c.b16 %v927, %v923
    %v1292 = vpack.c.b16 %v928, %v924
    %v1293 = vpack.c.b16 %v933, %v929
    %v1294 = vpack.c.b16 %v934, %v930
    %v1295 = vpack.c.b16 %v935, %v931
    %v1296 = vpack.c.b16 %v936, %v932
    %v1297 = vpack.c.b16 %v941, %v937
    %v1298 = vpack.c.b16 %v942, %v938
    %v1299 = vpack.c.b16 %v943, %v939
    %v1300 = vpack.c.b16 %v944, %v940
    %v1301 = vpack.c.b16 %v949, %v945
    %v1302 = vpack.c.b16 %v950, %v946
    %v1303 = vpack.c.b16 %v951, %v947
    %v1304 = vpack.c.b16 %v952, %v948
    %v1305 = vpack.c.b16 %v957, %v953
    %v1306 = vpack.c.b16 %v958, %v954
    %v1307 = vpack.c.b16 %v959, %v955
    %v1308 = vpack.c.b16 %v960, %v956
    %v1309 = vpack.c.b16 %v965, %v961
    %v1310 = vpack.c.b16 %v966, %v962
    %v1311 = vpack.c.b16 %v967, %v963
    %v1312 = vpack.c.b16 %v968, %v964
    %v1313 = vpack.c.b16 %v973, %v969
    %v1314 = vpack.c.b16 %v974, %v970
    %v1315 = vpack.c.b16 %v975, %v971
    %v1316 = vpack.c.b16 %v976, %v972
    %v1317 = vpack.c.b16 %v981, %v977
    %v1318 = vpack.c.b16 %v982, %v978
    %v1319 = vpack.c.b16 %v983, %v979
    %v1320 = vpack.c.b16 %v984, %v980
    %v1321 = vpack.c.b16 %v989, %v985
    %v1322 = vpack.c.b16 %v990, %v986
    %v1323 = vpack.c.b16 %v991, %v987
    %v1324 = vpack.c.b16 %v992, %v988
    %v1325 = vpack.c.b16 %v997, %v993
    %v1326 = vpack.c.b16 %v998, %v994
    %v1327 = vpack.c.b16 %v999, %v995
    %v1328 = vpack.c.b16 %v1000, %v996
    %v1329 = vpack.c.b16 %v1005, %v1001
    %v1330 = vpack.c.b16 %v1006, %v1002
    %v1331 = vpack.c.b16 %v1007, %v1003
    %v1332 = vpack.c.b16 %v1008, %v1004
    %v1333 = vpack.c.b16 %v1013, %v1009
    %v1334 = vpack.c.b16 %v1014, %v1010
    %v1335 = vpack.c.b16 %v1015, %v1011
    %v1336 = vpack.c.b16 %v1016, %v1012
    %v1337 = vpack.c.b16 %v1021, %v1017
    %v1338 = vpack.c.b16 %v1022, %v1018
    %v1339 = vpack.c.b16 %v1023, %v1019
    %v1340 = vpack.c.b16 %v1024, %v1020
    %v1341 = vpack.c.b16 %v1029, %v1025
    %v1342 = vpack.c.b16 %v1030, %v1026
    %v1343 = vpack.c.b16 %v1031, %v1027
    %v1344 = vpack.c.b16 %v1032, %v1028
    %v1345 = vpack.c.b16 %v1037, %v1033
    %v1346 = vpack.c.b16 %v1038, %v1034
    %v1347 = vpack.c.b16 %v1039, %v1035
    %v1348 = vpack.c.b16 %v1040, %v1036
    %v1349 = vpack.c.b16 %v1045, %v1041
    %v1350 = vpack.c.b16 %v1046, %v1042
    %v1351 = vpack.c.b16 %v1047, %v1043
    %v1352 = vpack.c.b16 %v1048, %v1044
    %v1353 = vpack.c.b16 %v1053, %v1049
    %v1354 = vpack.c.b16 %v1054, %v1050
    %v1355 = vpack.c.b16 %v1055, %v1051
    %v1356 = vpack.c.b16 %v1056, %v1052
    %v1357 = vpack.c.b16 %v1061, %v1057
    %v1358 = vpack.c.b16 %v1062, %v1058
    %v1359 = vpack.c.b16 %v1063, %v1059
    %v1360 = vpack.c.b16 %v1064, %v1060
    %v1361 = vpack.c.b16 %v1069, %v1065
    %v1362 = vpack.c.b16 %v1070, %v1066
    %v1363 = vpack.c.b16 %v1071, %v1067
    %v1364 = vpack.c.b16 %v1072, %v1068
    %v1365 = vpack.c.b16 %v1077, %v1073
    %v1366 = vpack.c.b16 %v1078, %v1074
    %v1367 = vpack.c.b16 %v1079, %v1075
    %v1368 = vpack.c.b16 %v1080, %v1076
    %v1369 = vpack.c.b16 %v1085, %v1081
    %v1370 = vpack.c.b16 %v1086, %v1082
    %v1371 = vpack.c.b16 %v1087, %v1083
    %v1372 = vpack.c.b16 %v1088, %v1084
    %v1373 = vpack.c.b16 %v1093, %v1089
    %v1374 = vpack.c.b16 %v1094, %v1090
    %v1375 = vpack.c.b16 %v1095, %v1091
    %v1376 = vpack.c.b16 %v1096, %v1092
    %v1377 = vpack.c.b16 %v1101, %v1097
    %v1378 = vpack.c.b16 %v1102, %v1098
    %v1379 = vpack.c.b16 %v1103, %v1099
    %v1380 = vpack.c.b16 %v1104, %v1100
    %v1381 = vpack.c.b16 %v1109, %v1105
    %v1382 = vpack.c.b16 %v1110, %v1106
    %v1383 = vpack.c.b16 %v1111, %v1107
    %v1384 = vpack.c.b16 %v1112, %v1108
    %v1385 = vpack.c.b16 %v1117, %v1113
    %v1386 = vpack.c.b16 %v1118, %v1114
    %v1387 = vpack.c.b16 %v1119, %v1115
    %v1388 = vpack.c.b16 %v1120, %v1116
    %v1389 = vpack.c.b16 %v1125, %v1121
    %v1390 = vpack.c.b16 %v1126, %v1122
    %v1391 = vpack.c.b16 %v1127, %v1123
    %v1392 = vpack.c.b16 %v1128, %v1124
    %v1393 = vpack.c.b16 %v1133, %v1129
    %v1394 = vpack.c.b16 %v1134, %v1130
    %v1395 = vpack.c.b16 %v1135, %v1131
    %v1396 = vpack.c.b16 %v1136, %v1132
    %v1397 = vpack.c.b16 %v1141, %v1137
    %v1398 = vpack.c.b16 %v1142, %v1138
    %v1399 = vpack.c.b16 %v1143, %v1139
    %v1400 = vpack.c.b16 %v1144, %v1140
    %1657 = vmatprep.subr.bf16.mxu0 %v1146
    %1658 = vmatpush1.bf16.msra.mxu0 %v1145
    %1659 = vmatprep.subr.bf16.mxu0 %v1150
    %1660 = vmatpush1.bf16.msra.mxu0 %v1149
    %1661 = vmatprep.subr.bf16.mxu0 %v1154
    %1662 = vmatpush1.bf16.msra.mxu0 %v1153
    %1663 = vmatprep.subr.bf16.mxu0 %v1158
    %1664 = vmatpush1.bf16.msra.mxu0 %v1157
    %1665 = vmatprep.subr.bf16.mxu0 %v1162
    %1666 = vmatpush1.bf16.msra.mxu0 %v1161
    %1667 = vmatprep.subr.bf16.mxu0 %v1166
    %1668 = vmatpush1.bf16.msra.mxu0 %v1165
    %1669 = vmatprep.subr.bf16.mxu0 %v1170
    %1670 = vmatpush1.bf16.msra.mxu0 %v1169
    %1671 = vmatprep.subr.bf16.mxu0 %v1174
    %1672 = vmatpush1.bf16.msra.mxu0 %v1173
    %1673 = vmatprep.subr.bf16.mxu0 %v1178
    %1674 = vmatpush1.bf16.msra.mxu0 %v1177
    %1675 = vmatprep.subr.bf16.mxu0 %v1182
    %1676 = vmatpush1.bf16.msra.mxu0 %v1181
    %1677 = vmatprep.subr.bf16.mxu0 %v1186
    %1678 = vmatpush1.bf16.msra.mxu0 %v1185
    %1679 = vmatprep.subr.bf16.mxu0 %v1190
    %1680 = vmatpush1.bf16.msra.mxu0 %v1189
    %1681 = vmatprep.subr.bf16.mxu0 %v1194
    %1682 = vmatpush1.bf16.msra.mxu0 %v1193
    %1683 = vmatprep.subr.bf16.mxu0 %v1198
    %1684 = vmatpush1.bf16.msra.mxu0 %v1197
    %1685 = vmatprep.subr.bf16.mxu0 %v1202
    %1686 = vmatpush1.bf16.msra.mxu0 %v1201
    %1687 = vmatprep.subr.bf16.mxu0 %v1206
    %1688 = vmatpush1.bf16.msra.mxu0 %v1205
    %1689 = vmatprep.mubr.bf16.mxu0 %v98
    %1690 = vmatmul.mubr.bf16.gmra.mrb[0].mxu0 %v97
    %v1691 = vpop.f32.mrb[0].mxu0
    %v1692 = vadd.f32 %v364, %v1691
    %v1693 = vpop.f32.mrb[0].mxu0
    %v1694 = vadd.f32 %v368, %v1693
    %v1695 = vpop.f32.mrb[0].mxu0
    %v1696 = vpop.f32.mrb[0].mxu0
    %1697 = vdwg.mxu0
    %1698 = vmatprep.subr.bf16.mxu0 %v1210
    %1699 = vmatpush1.bf16.msra.mxu0 %v1209
    %1700 = vmatprep.subr.bf16.mxu0 %v1214
    %1701 = vmatpush1.bf16.msra.mxu0 %v1213
    %1702 = vmatprep.subr.bf16.mxu0 %v1218
    %1703 = vmatpush1.bf16.msra.mxu0 %v1217
    %1704 = vmatprep.subr.bf16.mxu0 %v1222
    %1705 = vmatpush1.bf16.msra.mxu0 %v1221
    %1706 = vmatprep.subr.bf16.mxu0 %v1226
    %1707 = vmatpush1.bf16.msra.mxu0 %v1225
    %1708 = vmatprep.subr.bf16.mxu0 %v1230
    %1709 = vmatpush1.bf16.msra.mxu0 %v1229
    %1710 = vmatprep.subr.bf16.mxu0 %v1234
    %1711 = vmatpush1.bf16.msra.mxu0 %v1233
    %1712 = vmatprep.subr.bf16.mxu0 %v1238
    %1713 = vmatpush1.bf16.msra.mxu0 %v1237
    %1714 = vmatprep.subr.bf16.mxu0 %v1242
    %1715 = vmatpush1.bf16.msra.mxu0 %v1241
    %1716 = vmatprep.subr.bf16.mxu0 %v1246
    %1717 = vmatpush1.bf16.msra.mxu0 %v1245
    %1718 = vmatprep.subr.bf16.mxu0 %v1250
    %1719 = vmatpush1.bf16.msra.mxu0 %v1249
    %1720 = vmatprep.subr.bf16.mxu0 %v1254
    %1721 = vmatpush1.bf16.msra.mxu0 %v1253
    %1722 = vmatprep.subr.bf16.mxu0 %v1258
    %1723 = vmatpush1.bf16.msra.mxu0 %v1257
    %1724 = vmatprep.subr.bf16.mxu0 %v1262
    %1725 = vmatpush1.bf16.msra.mxu0 %v1261
    %1726 = vmatprep.subr.bf16.mxu0 %v1266
    %1727 = vmatpush1.bf16.msra.mxu0 %v1265
    %1728 = vmatprep.subr.bf16.mxu0 %v1270
    %1729 = vmatpush1.bf16.msra.mxu0 %v1269
    %1730 = vmatprep.mubr.bf16.mxu0 %v100
    %1731 = vmatmul.mubr.bf16.gmra.mrb[0].mxu0 %v99
    %v1732 = vpop.f32.mrb[0].mxu0
    %v1733 = vadd.f32 %v1692, %v1732
    %v1734 = vpop.f32.mrb[0].mxu0
    %v1735 = vadd.f32 %v1694, %v1734
    %v1736 = vpop.f32.mrb[0].mxu0
    %v1737 = vpop.f32.mrb[0].mxu0
    %1738 = vdwg.mxu0
    %1739 = vmatprep.subr.bf16.mxu0 %v1274
    %1740 = vmatpush1.bf16.msra.mxu0 %v1273
    %1741 = vmatprep.subr.bf16.mxu0 %v1278
    %1742 = vmatpush1.bf16.msra.mxu0 %v1277
    %1743 = vmatprep.subr.bf16.mxu0 %v1282
    %1744 = vmatpush1.bf16.msra.mxu0 %v1281
    %1745 = vmatprep.subr.bf16.mxu0 %v1286
    %1746 = vmatpush1.bf16.msra.mxu0 %v1285
    %1747 = vmatprep.subr.bf16.mxu0 %v1290
    %1748 = vmatpush1.bf16.msra.mxu0 %v1289
    %1749 = vmatprep.subr.bf16.mxu0 %v1294
    %1750 = vmatpush1.bf16.msra.mxu0 %v1293
    %1751 = vmatprep.subr.bf16.mxu0 %v1298
    %1752 = vmatpush1.bf16.msra.mxu0 %v1297
    %1753 = vmatprep.subr.bf16.mxu0 %v1302
    %1754 = vmatpush1.bf16.msra.mxu0 %v1301
    %1755 = vmatprep.subr.bf16.mxu0 %v1306
    %1756 = vmatpush1.bf16.msra.mxu0 %v1305
    %1757 = vmatprep.subr.bf16.mxu0 %v1310
    %1758 = vmatpush1.bf16.msra.mxu0 %v1309
    %1759 = vmatprep.subr.bf16.mxu0 %v1314
    %1760 = vmatpush1.bf16.msra.mxu0 %v1313
    %1761 = vmatprep.subr.bf16.mxu0 %v1318
    %1762 = vmatpush1.bf16.msra.mxu0 %v1317
    %1763 = vmatprep.subr.bf16.mxu0 %v1322
    %1764 = vmatpush1.bf16.msra.mxu0 %v1321
    %1765 = vmatprep.subr.bf16.mxu0 %v1326
    %1766 = vmatpush1.bf16.msra.mxu0 %v1325
    %1767 = vmatprep.subr.bf16.mxu0 %v1330
    %1768 = vmatpush1.bf16.msra.mxu0 %v1329
    %1769 = vmatprep.subr.bf16.mxu0 %v1334
    %1770 = vmatpush1.bf16.msra.mxu0 %v1333
    %1771 = vmatprep.mubr.bf16.mxu0 %v102
    %1772 = vmatmul.mubr.bf16.gmra.mrb[0].mxu0 %v101
    %v1773 = vpop.f32.mrb[0].mxu0
    %v1774 = vadd.f32 %v1733, %v1773
    %v1775 = vpop.f32.mrb[0].mxu0
    %v1776 = vadd.f32 %v1735, %v1775
    %v1777 = vpop.f32.mrb[0].mxu0
    %v1778 = vpop.f32.mrb[0].mxu0
    %1779 = vdwg.mxu0
    %1780 = vmatprep.subr.bf16.mxu0 %v1338
    %1781 = vmatpush1.bf16.msra.mxu0 %v1337
    %1782 = vmatprep.subr.bf16.mxu0 %v1342
    %1783 = vmatpush1.bf16.msra.mxu0 %v1341
    %1784 = vmatprep.subr.bf16.mxu0 %v1346
    %1785 = vmatpush1.bf16.msra.mxu0 %v1345
    %1786 = vmatprep.subr.bf16.mxu0 %v1350
    %1787 = vmatpush1.bf16.msra.mxu0 %v1349
    %1788 = vmatprep.subr.bf16.mxu0 %v1354
    %1789 = vmatpush1.bf16.msra.mxu0 %v1353
    %1790 = vmatprep.subr.bf16.mxu0 %v1358
    %1791 = vmatpush1.bf16.msra.mxu0 %v1357
    %1792 = vmatprep.subr.bf16.mxu0 %v1362
    %1793 = vmatpush1.bf16.msra.mxu0 %v1361
    %1794 = vmatprep.subr.bf16.mxu0 %v1366
    %1795 = vmatpush1.bf16.msra.mxu0 %v1365
    %1796 = vmatprep.subr.bf16.mxu0 %v1370
    %1797 = vmatpush1.bf16.msra.mxu0 %v1369
    %1798 = vmatprep.subr.bf16.mxu0 %v1374
    %1799 = vmatpush1.bf16.msra.mxu0 %v1373
    %1800 = vmatprep.subr.bf16.mxu0 %v1378
    %1801 = vmatpush1.bf16.msra.mxu0 %v1377
    %1802 = vmatprep.subr.bf16.mxu0 %v1382
    %1803 = vmatpush1.bf16.msra.mxu0 %v1381
    %1804 = vmatprep.subr.bf16.mxu0 %v1386
    %1805 = vmatpush1.bf16.msra.mxu0 %v1385
    %1806 = vmatprep.subr.bf16.mxu0 %v1390
    %1807 = vmatpush1.bf16.msra.mxu0 %v1389
    %1808 = vmatprep.subr.bf16.mxu0 %v1394
    %1809 = vmatpush1.bf16.msra.mxu0 %v1393
    %1810 = vmatprep.subr.bf16.mxu0 %v1398
    %1811 = vmatpush1.bf16.msra.mxu0 %v1397
    %1812 = vmatprep.mubr.bf16.mxu0 %v104
    %1813 = vmatmul.mubr.bf16.gmra.mrb[0].mxu0 %v103
    %v1814 = vpop.f32.mrb[0].mxu0
    %v1815 = vadd.f32 %v1774, %v1814
    %v1816 = vpop.f32.mrb[0].mxu0
    %v1817 = vadd.f32 %v1776, %v1816
    %v1818 = vpop.f32.mrb[0].mxu0
    %v1819 = vpop.f32.mrb[0].mxu0
    %1820 = vdwg.mxu0
    %1821 = vmatprep.subr.bf16.mxu0 %v1148
    %1822 = vmatpush1.bf16.msra.mxu0 %v1147
    %1823 = vmatprep.subr.bf16.mxu0 %v1152
    %1824 = vmatpush1.bf16.msra.mxu0 %v1151
    %1825 = vmatprep.subr.bf16.mxu0 %v1156
    %1826 = vmatpush1.bf16.msra.mxu0 %v1155
    %1827 = vmatprep.subr.bf16.mxu0 %v1160
    %1828 = vmatpush1.bf16.msra.mxu0 %v1159
    %1829 = vmatprep.subr.bf16.mxu0 %v1164
    %1830 = vmatpush1.bf16.msra.mxu0 %v1163
    %1831 = vmatprep.subr.bf16.mxu0 %v1168
    %1832 = vmatpush1.bf16.msra.mxu0 %v1167
    %1833 = vmatprep.subr.bf16.mxu0 %v1172
    %1834 = vmatpush1.bf16.msra.mxu0 %v1171
    %1835 = vmatprep.subr.bf16.mxu0 %v1176
    %1836 = vmatpush1.bf16.msra.mxu0 %v1175
    %1837 = vmatprep.subr.bf16.mxu0 %v1180
    %1838 = vmatpush1.bf16.msra.mxu0 %v1179
    %1839 = vmatprep.subr.bf16.mxu0 %v1184
    %1840 = vmatpush1.bf16.msra.mxu0 %v1183
    %1841 = vmatprep.subr.bf16.mxu0 %v1188
    %1842 = vmatpush1.bf16.msra.mxu0 %v1187
    %1843 = vmatprep.subr.bf16.mxu0 %v1192
    %1844 = vmatpush1.bf16.msra.mxu0 %v1191
    %1845 = vmatprep.subr.bf16.mxu0 %v1196
    %1846 = vmatpush1.bf16.msra.mxu0 %v1195
    %1847 = vmatprep.subr.bf16.mxu0 %v1200
    %1848 = vmatpush1.bf16.msra.mxu0 %v1199
    %1849 = vmatprep.subr.bf16.mxu0 %v1204
    %1850 = vmatpush1.bf16.msra.mxu0 %v1203
    %1851 = vmatprep.subr.bf16.mxu0 %v1208
    %1852 = vmatpush1.bf16.msra.mxu0 %v1207
    %1853 = vmatprep.mubr.bf16.mxu0 %v98
    %1854 = vmatmul.mubr.bf16.gmra.mrb[0].mxu0 %v97
    %v1855 = vpop.f32.mrb[0].mxu0
    %v1856 = vadd.f32 %v372, %v1855
    %v1857 = vpop.f32.mrb[0].mxu0
    %v1858 = vadd.f32 %v376, %v1857
    %v1859 = vpop.f32.mrb[0].mxu0
    %v1860 = vpop.f32.mrb[0].mxu0
    %1861 = vdwg.mxu0
    %1862 = vmatprep.subr.bf16.mxu0 %v1212
    %1863 = vmatpush1.bf16.msra.mxu0 %v1211
    %1864 = vmatprep.subr.bf16.mxu0 %v1216
    %1865 = vmatpush1.bf16.msra.mxu0 %v1215
    %1866 = vmatprep.subr.bf16.mxu0 %v1220
    %1867 = vmatpush1.bf16.msra.mxu0 %v1219
    %1868 = vmatprep.subr.bf16.mxu0 %v1224
    %1869 = vmatpush1.bf16.msra.mxu0 %v1223
    %1870 = vmatprep.subr.bf16.mxu0 %v1228
    %1871 = vmatpush1.bf16.msra.mxu0 %v1227
    %1872 = vmatprep.subr.bf16.mxu0 %v1232
    %1873 = vmatpush1.bf16.msra.mxu0 %v1231
    %1874 = vmatprep.subr.bf16.mxu0 %v1236
    %1875 = vmatpush1.bf16.msra.mxu0 %v1235
    %1876 = vmatprep.subr.bf16.mxu0 %v1240
    %1877 = vmatpush1.bf16.msra.mxu0 %v1239
    %1878 = vmatprep.subr.bf16.mxu0 %v1244
    %1879 = vmatpush1.bf16.msra.mxu0 %v1243
    %1880 = vmatprep.subr.bf16.mxu0 %v1248
    %1881 = vmatpush1.bf16.msra.mxu0 %v1247
    %1882 = vmatprep.subr.bf16.mxu0 %v1252
    %1883 = vmatpush1.bf16.msra.mxu0 %v1251
    %1884 = vmatprep.subr.bf16.mxu0 %v1256
    %1885 = vmatpush1.bf16.msra.mxu0 %v1255
    %1886 = vmatprep.subr.bf16.mxu0 %v1260
    %1887 = vmatpush1.bf16.msra.mxu0 %v1259
    %1888 = vmatprep.subr.bf16.mxu0 %v1264
    %1889 = vmatpush1.bf16.msra.mxu0 %v1263
    %1890 = vmatprep.subr.bf16.mxu0 %v1268
    %1891 = vmatpush1.bf16.msra.mxu0 %v1267
    %1892 = vmatprep.subr.bf16.mxu0 %v1272
    %1893 = vmatpush1.bf16.msra.mxu0 %v1271
    %1894 = vmatprep.mubr.bf16.mxu0 %v100
    %1895 = vmatmul.mubr.bf16.gmra.mrb[0].mxu0 %v99
    %v1896 = vpop.f32.mrb[0].mxu0
    %v1897 = vadd.f32 %v1856, %v1896
    %v1898 = vpop.f32.mrb[0].mxu0
    %v1899 = vadd.f32 %v1858, %v1898
    %v1900 = vpop.f32.mrb[0].mxu0
    %v1901 = vpop.f32.mrb[0].mxu0
    %1902 = vdwg.mxu0
    %1903 = vmatprep.subr.bf16.mxu0 %v1276
    %1904 = vmatpush1.bf16.msra.mxu0 %v1275
    %1905 = vmatprep.subr.bf16.mxu0 %v1280
    %1906 = vmatpush1.bf16.msra.mxu0 %v1279
    %1907 = vmatprep.subr.bf16.mxu0 %v1284
    %1908 = vmatpush1.bf16.msra.mxu0 %v1283
    %1909 = vmatprep.subr.bf16.mxu0 %v1288
    %1910 = vmatpush1.bf16.msra.mxu0 %v1287
    %1911 = vmatprep.subr.bf16.mxu0 %v1292
    %1912 = vmatpush1.bf16.msra.mxu0 %v1291
    %1913 = vmatprep.subr.bf16.mxu0 %v1296
    %1914 = vmatpush1.bf16.msra.mxu0 %v1295
    %1915 = vmatprep.subr.bf16.mxu0 %v1300
    %1916 = vmatpush1.bf16.msra.mxu0 %v1299
    %1917 = vmatprep.subr.bf16.mxu0 %v1304
    %1918 = vmatpush1.bf16.msra.mxu0 %v1303
    %1919 = vmatprep.subr.bf16.mxu0 %v1308
    %1920 = vmatpush1.bf16.msra.mxu0 %v1307
    %1921 = vmatprep.subr.bf16.mxu0 %v1312
    %1922 = vmatpush1.bf16.msra.mxu0 %v1311
    %1923 = vmatprep.subr.bf16.mxu0 %v1316
    %1924 = vmatpush1.bf16.msra.mxu0 %v1315
    %1925 = vmatprep.subr.bf16.mxu0 %v1320
    %1926 = vmatpush1.bf16.msra.mxu0 %v1319
    %1927 = vmatprep.subr.bf16.mxu0 %v1324
    %1928 = vmatpush1.bf16.msra.mxu0 %v1323
    %1929 = vmatprep.subr.bf16.mxu0 %v1328
    %1930 = vmatpush1.bf16.msra.mxu0 %v1327
    %1931 = vmatprep.subr.bf16.mxu0 %v1332
    %1932 = vmatpush1.bf16.msra.mxu0 %v1331
    %1933 = vmatprep.subr.bf16.mxu0 %v1336
    %1934 = vmatpush1.bf16.msra.mxu0 %v1335
    %1935 = vmatprep.mubr.bf16.mxu0 %v102
    %1936 = vmatmul.mubr.bf16.gmra.mrb[0].mxu0 %v101
    %v1937 = vpop.f32.mrb[0].mxu0
    %v1938 = vadd.f32 %v1897, %v1937
    %v1939 = vpop.f32.mrb[0].mxu0
    %v1940 = vadd.f32 %v1899, %v1939
    %v1941 = vpop.f32.mrb[0].mxu0
    %v1942 = vpop.f32.mrb[0].mxu0
    %1943 = vdwg.mxu0
    %1944 = vmatprep.subr.bf16.mxu0 %v1340
    %1945 = vmatpush1.bf16.msra.mxu0 %v1339
    %1946 = vmatprep.subr.bf16.mxu0 %v1344
    %1947 = vmatpush1.bf16.msra.mxu0 %v1343
    %1948 = vmatprep.subr.bf16.mxu0 %v1348
    %1949 = vmatpush1.bf16.msra.mxu0 %v1347
    %1950 = vmatprep.subr.bf16.mxu0 %v1352
    %1951 = vmatpush1.bf16.msra.mxu0 %v1351
    %1952 = vmatprep.subr.bf16.mxu0 %v1356
    %1953 = vmatpush1.bf16.msra.mxu0 %v1355
    %1954 = vmatprep.subr.bf16.mxu0 %v1360
    %1955 = vmatpush1.bf16.msra.mxu0 %v1359
    %1956 = vmatprep.subr.bf16.mxu0 %v1364
    %1957 = vmatpush1.bf16.msra.mxu0 %v1363
    %1958 = vmatprep.subr.bf16.mxu0 %v1368
    %1959 = vmatpush1.bf16.msra.mxu0 %v1367
    %1960 = vmatprep.subr.bf16.mxu0 %v1372
    %1961 = vmatpush1.bf16.msra.mxu0 %v1371
    %1962 = vmatprep.subr.bf16.mxu0 %v1376
    %1963 = vmatpush1.bf16.msra.mxu0 %v1375
    %1964 = vmatprep.subr.bf16.mxu0 %v1380
    %1965 = vmatpush1.bf16.msra.mxu0 %v1379
    %1966 = vmatprep.subr.bf16.mxu0 %v1384
    %1967 = vmatpush1.bf16.msra.mxu0 %v1383
    %1968 = vmatprep.subr.bf16.mxu0 %v1388
    %1969 = vmatpush1.bf16.msra.mxu0 %v1387
    %1970 = vmatprep.subr.bf16.mxu0 %v1392
    %1971 = vmatpush1.bf16.msra.mxu0 %v1391
    %1972 = vmatprep.subr.bf16.mxu0 %v1396
    %1973 = vmatpush1.bf16.msra.mxu0 %v1395
    %1974 = vmatprep.subr.bf16.mxu0 %v1400
    %1975 = vmatpush1.bf16.msra.mxu0 %v1399
    %1976 = vmatprep.mubr.bf16.mxu0 %v104
    %1977 = vmatmul.mubr.bf16.gmra.mrb[0].mxu0 %v103
    %v1978 = vpop.f32.mrb[0].mxu0
    %v1979 = vadd.f32 %v1938, %v1978
    %v1980 = vpop.f32.mrb[0].mxu0
    %v1981 = vadd.f32 %v1940, %v1980
    %v1982 = vpop.f32.mrb[0].mxu0
    %v1983 = vpop.f32.mrb[0].mxu0
    %1984 = vdwg.mxu0
    %v1985 = vmax.f32 %v1815, 0.0
    %v1986 = vmax.f32 %v1817, 0.0
    %v1987 = vmax.f32 %v1979, 0.0
    %v1988 = vmax.f32 %v1981, 0.0
    %v1989 = vpack.c.bf16 %v1985, %v1985
    %v1990 = vpack.c.bf16 %v1986, %v1986
    %v1991 = vpack.c.bf16 %v1987, %v1987
    %v1992 = vpack.c.bf16 %v1988, %v1988
    %v1993 = vld [vmem:[#allocation4] sm:$0xff]
    %v1994 = vld [vmem:[#allocation4 + $0x8] sm:$0xff]
    %v1995 = vld [vmem:[#allocation4 + $0x10] sm:$0xff]
    %v1996 = vld [vmem:[#allocation4 + $0x18] sm:$0xff]
    %v1997 = vld [vmem:[#allocation4 + $0x20] sm:$0xff]
    %v1998 = vld [vmem:[#allocation4 + $0x28] sm:$0xff]
    %v1999 = vld [vmem:[#allocation4 + $0x30] sm:$0xff]
    %v2000 = vld [vmem:[#allocation4 + $0x38] sm:$0xff]
    %v2001 = vld [vmem:[#allocation4 + $0x40] sm:$0xff]
    %v2002 = vld [vmem:[#allocation4 + $0x48] sm:$0xff]
    %v2003 = vld [vmem:[#allocation4 + $0x50] sm:$0xff]
    %v2004 = vld [vmem:[#allocation4 + $0x58] sm:$0xff]
    %v2005 = vld [vmem:[#allocation4 + $0x60] sm:$0xff]
    %v2006 = vld [vmem:[#allocation4 + $0x68] sm:$0xff]
    %v2007 = vld [vmem:[#allocation4 + $0x70] sm:$0xff]
    %v2008 = vld [vmem:[#allocation4 + $0x78] sm:$0xff]
    %v2009 = vld [vmem:[#allocation4 + $0x80] sm:$0xff]
    %v2010 = vld [vmem:[#allocation4 + $0x88] sm:$0xff]
    %v2011 = vld [vmem:[#allocation4 + $0x90] sm:$0xff]
    %v2012 = vld [vmem:[#allocation4 + $0x98] sm:$0xff]
    %v2013 = vld [vmem:[#allocation4 + $0xa0] sm:$0xff]
    %v2014 = vld [vmem:[#allocation4 + $0xa8] sm:$0xff]
    %v2015 = vld [vmem:[#allocation4 + $0xb0] sm:$0xff]
    %v2016 = vld [vmem:[#allocation4 + $0xb8] sm:$0xff]
    %v2017 = vld [vmem:[#allocation4 + $0xc0] sm:$0xff]
    %v2018 = vld [vmem:[#allocation4 + $0xc8] sm:$0xff]
    %v2019 = vld [vmem:[#allocation4 + $0xd0] sm:$0xff]
    %v2020 = vld [vmem:[#allocation4 + $0xd8] sm:$0xff]
    %v2021 = vld [vmem:[#allocation4 + $0xe0] sm:$0xff]
    %v2022 = vld [vmem:[#allocation4 + $0xe8] sm:$0xff]
    %v2023 = vld [vmem:[#allocation4 + $0xf0] sm:$0xff]
    %v2024 = vld [vmem:[#allocation4 + $0xf8] sm:$0xff]
    %v2025 = vld [vmem:[#allocation4 + $0x100] sm:$0xff]
    %v2026 = vld [vmem:[#allocation4 + $0x108] sm:$0xff]
    %v2027 = vld [vmem:[#allocation4 + $0x110] sm:$0xff]
    %v2028 = vld [vmem:[#allocation4 + $0x118] sm:$0xff]
    %v2029 = vld [vmem:[#allocation4 + $0x120] sm:$0xff]
    %v2030 = vld [vmem:[#allocation4 + $0x128] sm:$0xff]
    %v2031 = vld [vmem:[#allocation4 + $0x130] sm:$0xff]
    %v2032 = vld [vmem:[#allocation4 + $0x138] sm:$0xff]
    %v2033 = vld [vmem:[#allocation4 + $0x140] sm:$0xff]
    %v2034 = vld [vmem:[#allocation4 + $0x148] sm:$0xff]
    %v2035 = vld [vmem:[#allocation4 + $0x150] sm:$0xff]
    %v2036 = vld [vmem:[#allocation4 + $0x158] sm:$0xff]
    %v2037 = vld [vmem:[#allocation4 + $0x160] sm:$0xff]
    %v2038 = vld [vmem:[#allocation4 + $0x168] sm:$0xff]
    %v2039 = vld [vmem:[#allocation4 + $0x170] sm:$0xff]
    %v2040 = vld [vmem:[#allocation4 + $0x178] sm:$0xff]
    %v2041 = vld [vmem:[#allocation4 + $0x180] sm:$0xff]
    %v2042 = vld [vmem:[#allocation4 + $0x188] sm:$0xff]
    %v2043 = vld [vmem:[#allocation4 + $0x190] sm:$0xff]
    %v2044 = vld [vmem:[#allocation4 + $0x198] sm:$0xff]
    %v2045 = vld [vmem:[#allocation4 + $0x1a0] sm:$0xff]
    %v2046 = vld [vmem:[#allocation4 + $0x1a8] sm:$0xff]
    %v2047 = vld [vmem:[#allocation4 + $0x1b0] sm:$0xff]
    %v2048 = vld [vmem:[#allocation4 + $0x1b8] sm:$0xff]
    %v2049 = vld [vmem:[#allocation4 + $0x1c0] sm:$0xff]
    %v2050 = vld [vmem:[#allocation4 + $0x1c8] sm:$0xff]
    %v2051 = vld [vmem:[#allocation4 + $0x1d0] sm:$0xff]
    %v2052 = vld [vmem:[#allocation4 + $0x1d8] sm:$0xff]
    %v2053 = vld [vmem:[#allocation4 + $0x1e0] sm:$0xff]
    %v2054 = vld [vmem:[#allocation4 + $0x1e8] sm:$0xff]
    %v2055 = vld [vmem:[#allocation4 + $0x1f0] sm:$0xff]
    %v2056 = vld [vmem:[#allocation4 + $0x1f8] sm:$0xff]
    %v2057 = vlaneseq
    %v2058 = vshrl.u32 %v2057, 7
    %v2059 = vsub.s32 1, %v2058
    %v2060 = vrot.slane %v85, %v2059
    %v2061 = vlaneseq
    %v2062 = vshrl.u32 %v2061, 7
    %v2063 = vsub.s32 1, %v2062
    %v2064 = vrot.slane %v86, %v2063
    %v2129 = vunpack.c.l.b16 %v1993
    %v2130 = vunpack.c.h.b16 %v1993
    %v2131 = vunpack.c.l.b16 %v1994
    %v2132 = vunpack.c.h.b16 %v1994
    %v2133 = vunpack.c.l.b16 %v1995
    %v2134 = vunpack.c.h.b16 %v1995
    %v2135 = vunpack.c.l.b16 %v1996
    %v2136 = vunpack.c.h.b16 %v1996
    %v2137 = vunpack.c.l.b16 %v1997
    %v2138 = vunpack.c.h.b16 %v1997
    %v2139 = vunpack.c.l.b16 %v1998
    %v2140 = vunpack.c.h.b16 %v1998
    %v2141 = vunpack.c.l.b16 %v1999
    %v2142 = vunpack.c.h.b16 %v1999
    %v2143 = vunpack.c.l.b16 %v2000
    %v2144 = vunpack.c.h.b16 %v2000
    %v2145 = vunpack.c.l.b16 %v2001
    %v2146 = vunpack.c.h.b16 %v2001
    %v2147 = vunpack.c.l.b16 %v2002
    %v2148 = vunpack.c.h.b16 %v2002
    %v2149 = vunpack.c.l.b16 %v2003
    %v2150 = vunpack.c.h.b16 %v2003
    %v2151 = vunpack.c.l.b16 %v2004
    %v2152 = vunpack.c.h.b16 %v2004
    %v2153 = vunpack.c.l.b16 %v2005
    %v2154 = vunpack.c.h.b16 %v2005
    %v2155 = vunpack.c.l.b16 %v2006
    %v2156 = vunpack.c.h.b16 %v2006
    %v2157 = vunpack.c.l.b16 %v2007
    %v2158 = vunpack.c.h.b16 %v2007
    %v2159 = vunpack.c.l.b16 %v2008
    %v2160 = vunpack.c.h.b16 %v2008
    %v2161 = vunpack.c.l.b16 %v2009
    %v2162 = vunpack.c.h.b16 %v2009
    %v2163 = vunpack.c.l.b16 %v2010
    %v2164 = vunpack.c.h.b16 %v2010
    %v2165 = vunpack.c.l.b16 %v2011
    %v2166 = vunpack.c.h.b16 %v2011
    %v2167 = vunpack.c.l.b16 %v2012
    %v2168 = vunpack.c.h.b16 %v2012
    %v2169 = vunpack.c.l.b16 %v2013
    %v2170 = vunpack.c.h.b16 %v2013
    %v2171 = vunpack.c.l.b16 %v2014
    %v2172 = vunpack.c.h.b16 %v2014
    %v2173 = vunpack.c.l.b16 %v2015
    %v2174 = vunpack.c.h.b16 %v2015
    %v2175 = vunpack.c.l.b16 %v2016
    %v2176 = vunpack.c.h.b16 %v2016
    %v2177 = vunpack.c.l.b16 %v2017
    %v2178 = vunpack.c.h.b16 %v2017
    %v2179 = vunpack.c.l.b16 %v2018
    %v2180 = vunpack.c.h.b16 %v2018
    %v2181 = vunpack.c.l.b16 %v2019
    %v2182 = vunpack.c.h.b16 %v2019
    %v2183 = vunpack.c.l.b16 %v2020
    %v2184 = vunpack.c.h.b16 %v2020
    %v2185 = vunpack.c.l.b16 %v2021
    %v2186 = vunpack.c.h.b16 %v2021
    %v2187 = vunpack.c.l.b16 %v2022
    %v2188 = vunpack.c.h.b16 %v2022
    %v2189 = vunpack.c.l.b16 %v2023
    %v2190 = vunpack.c.h.b16 %v2023
    %v2191 = vunpack.c.l.b16 %v2024
    %v2192 = vunpack.c.h.b16 %v2024
    %v2193 = vunpack.c.l.b16 %v2025
    %v2194 = vunpack.c.h.b16 %v2025
    %v2195 = vunpack.c.l.b16 %v2026
    %v2196 = vunpack.c.h.b16 %v2026
    %v2197 = vunpack.c.l.b16 %v2027
    %v2198 = vunpack.c.h.b16 %v2027
    %v2199 = vunpack.c.l.b16 %v2028
    %v2200 = vunpack.c.h.b16 %v2028
    %v2201 = vunpack.c.l.b16 %v2029
    %v2202 = vunpack.c.h.b16 %v2029
    %v2203 = vunpack.c.l.b16 %v2030
    %v2204 = vunpack.c.h.b16 %v2030
    %v2205 = vunpack.c.l.b16 %v2031
    %v2206 = vunpack.c.h.b16 %v2031
    %v2207 = vunpack.c.l.b16 %v2032
    %v2208 = vunpack.c.h.b16 %v2032
    %v2209 = vunpack.c.l.b16 %v2033
    %v2210 = vunpack.c.h.b16 %v2033
    %v2211 = vunpack.c.l.b16 %v2034
    %v2212 = vunpack.c.h.b16 %v2034
    %v2213 = vunpack.c.l.b16 %v2035
    %v2214 = vunpack.c.h.b16 %v2035
    %v2215 = vunpack.c.l.b16 %v2036
    %v2216 = vunpack.c.h.b16 %v2036
    %v2217 = vunpack.c.l.b16 %v2037
    %v2218 = vunpack.c.h.b16 %v2037
    %v2219 = vunpack.c.l.b16 %v2038
    %v2220 = vunpack.c.h.b16 %v2038
    %v2221 = vunpack.c.l.b16 %v2039
    %v2222 = vunpack.c.h.b16 %v2039
    %v2223 = vunpack.c.l.b16 %v2040
    %v2224 = vunpack.c.h.b16 %v2040
    %v2225 = vunpack.c.l.b16 %v2041
    %v2226 = vunpack.c.h.b16 %v2041
    %v2227 = vunpack.c.l.b16 %v2042
    %v2228 = vunpack.c.h.b16 %v2042
    %v2229 = vunpack.c.l.b16 %v2043
    %v2230 = vunpack.c.h.b16 %v2043
    %v2231 = vunpack.c.l.b16 %v2044
    %v2232 = vunpack.c.h.b16 %v2044
    %v2233 = vunpack.c.l.b16 %v2045
    %v2234 = vunpack.c.h.b16 %v2045
    %v2235 = vunpack.c.l.b16 %v2046
    %v2236 = vunpack.c.h.b16 %v2046
    %v2237 = vunpack.c.l.b16 %v2047
    %v2238 = vunpack.c.h.b16 %v2047
    %v2239 = vunpack.c.l.b16 %v2048
    %v2240 = vunpack.c.h.b16 %v2048
    %v2241 = vunpack.c.l.b16 %v2049
    %v2242 = vunpack.c.h.b16 %v2049
    %v2243 = vunpack.c.l.b16 %v2050
    %v2244 = vunpack.c.h.b16 %v2050
    %v2245 = vunpack.c.l.b16 %v2051
    %v2246 = vunpack.c.h.b16 %v2051
    %v2247 = vunpack.c.l.b16 %v2052
    %v2248 = vunpack.c.h.b16 %v2052
    %v2249 = vunpack.c.l.b16 %v2053
    %v2250 = vunpack.c.h.b16 %v2053
    %v2251 = vunpack.c.l.b16 %v2054
    %v2252 = vunpack.c.h.b16 %v2054
    %v2253 = vunpack.c.l.b16 %v2055
    %v2254 = vunpack.c.h.b16 %v2055
    %v2255 = vunpack.c.l.b16 %v2056
    %v2256 = vunpack.c.h.b16 %v2056
    %v2257 = vpack.c.b16 %v2131, %v2129
    %v2258 = vpack.c.b16 %v2132, %v2130
    %v2259 = vpack.c.b16 %v2135, %v2133
    %v2260 = vpack.c.b16 %v2136, %v2134
    %v2261 = vpack.c.b16 %v2139, %v2137
    %v2262 = vpack.c.b16 %v2140, %v2138
    %v2263 = vpack.c.b16 %v2143, %v2141
    %v2264 = vpack.c.b16 %v2144, %v2142
    %v2265 = vpack.c.b16 %v2147, %v2145
    %v2266 = vpack.c.b16 %v2148, %v2146
    %v2267 = vpack.c.b16 %v2151, %v2149
    %v2268 = vpack.c.b16 %v2152, %v2150
    %v2269 = vpack.c.b16 %v2155, %v2153
    %v2270 = vpack.c.b16 %v2156, %v2154
    %v2271 = vpack.c.b16 %v2159, %v2157
    %v2272 = vpack.c.b16 %v2160, %v2158
    %v2273 = vpack.c.b16 %v2163, %v2161
    %v2274 = vpack.c.b16 %v2164, %v2162
    %v2275 = vpack.c.b16 %v2167, %v2165
    %v2276 = vpack.c.b16 %v2168, %v2166
    %v2277 = vpack.c.b16 %v2171, %v2169
    %v2278 = vpack.c.b16 %v2172, %v2170
    %v2279 = vpack.c.b16 %v2175, %v2173
    %v2280 = vpack.c.b16 %v2176, %v2174
    %v2281 = vpack.c.b16 %v2179, %v2177
    %v2282 = vpack.c.b16 %v2180, %v2178
    %v2283 = vpack.c.b16 %v2183, %v2181
    %v2284 = vpack.c.b16 %v2184, %v2182
    %v2285 = vpack.c.b16 %v2187, %v2185
    %v2286 = vpack.c.b16 %v2188, %v2186
    %v2287 = vpack.c.b16 %v2191, %v2189
    %v2288 = vpack.c.b16 %v2192, %v2190
    %v2289 = vpack.c.b16 %v2195, %v2193
    %v2290 = vpack.c.b16 %v2196, %v2194
    %v2291 = vpack.c.b16 %v2199, %v2197
    %v2292 = vpack.c.b16 %v2200, %v2198
    %v2293 = vpack.c.b16 %v2203, %v2201
    %v2294 = vpack.c.b16 %v2204, %v2202
    %v2295 = vpack.c.b16 %v2207, %v2205
    %v2296 = vpack.c.b16 %v2208, %v2206
    %v2297 = vpack.c.b16 %v2211, %v2209
    %v2298 = vpack.c.b16 %v2212, %v2210
    %v2299 = vpack.c.b16 %v2215, %v2213
    %v2300 = vpack.c.b16 %v2216, %v2214
    %v2301 = vpack.c.b16 %v2219, %v2217
    %v2302 = vpack.c.b16 %v2220, %v2218
    %v2303 = vpack.c.b16 %v2223, %v2221
    %v2304 = vpack.c.b16 %v2224, %v2222
    %v2305 = vpack.c.b16 %v2227, %v2225
    %v2306 = vpack.c.b16 %v2228, %v2226
    %v2307 = vpack.c.b16 %v2231, %v2229
    %v2308 = vpack.c.b16 %v2232, %v2230
    %v2309 = vpack.c.b16 %v2235, %v2233
    %v2310 = vpack.c.b16 %v2236, %v2234
    %v2311 = vpack.c.b16 %v2239, %v2237
    %v2312 = vpack.c.b16 %v2240, %v2238
    %v2313 = vpack.c.b16 %v2243, %v2241
    %v2314 = vpack.c.b16 %v2244, %v2242
    %v2315 = vpack.c.b16 %v2247, %v2245
    %v2316 = vpack.c.b16 %v2248, %v2246
    %v2317 = vpack.c.b16 %v2251, %v2249
    %v2318 = vpack.c.b16 %v2252, %v2250
    %v2319 = vpack.c.b16 %v2255, %v2253
    %v2320 = vpack.c.b16 %v2256, %v2254
    %2385 = vmatprep.subr.bf16.mxu0 %v2258
    %2386 = vmatpush1.bf16.msra.mxu0 %v2257
    %2387 = vmatprep.subr.bf16.mxu0 %v2260
    %2388 = vmatpush1.bf16.msra.mxu0 %v2259
    %2389 = vmatprep.subr.bf16.mxu0 %v2262
    %2390 = vmatpush1.bf16.msra.mxu0 %v2261
    %2391 = vmatprep.subr.bf16.mxu0 %v2264
    %2392 = vmatpush1.bf16.msra.mxu0 %v2263
    %2393 = vmatprep.subr.bf16.mxu0 %v2266
    %2394 = vmatpush1.bf16.msra.mxu0 %v2265
    %2395 = vmatprep.subr.bf16.mxu0 %v2268
    %2396 = vmatpush1.bf16.msra.mxu0 %v2267
    %2397 = vmatprep.subr.bf16.mxu0 %v2270
    %2398 = vmatpush1.bf16.msra.mxu0 %v2269
    %2399 = vmatprep.subr.bf16.mxu0 %v2272
    %2400 = vmatpush1.bf16.msra.mxu0 %v2271
    %2401 = vmatprep.subr.bf16.mxu0 %v2274
    %2402 = vmatpush1.bf16.msra.mxu0 %v2273
    %2403 = vmatprep.subr.bf16.mxu0 %v2276
    %2404 = vmatpush1.bf16.msra.mxu0 %v2275
    %2405 = vmatprep.subr.bf16.mxu0 %v2278
    %2406 = vmatpush1.bf16.msra.mxu0 %v2277
    %2407 = vmatprep.subr.bf16.mxu0 %v2280
    %2408 = vmatpush1.bf16.msra.mxu0 %v2279
    %2409 = vmatprep.subr.bf16.mxu0 %v2282
    %2410 = vmatpush1.bf16.msra.mxu0 %v2281
    %2411 = vmatprep.subr.bf16.mxu0 %v2284
    %2412 = vmatpush1.bf16.msra.mxu0 %v2283
    %2413 = vmatprep.subr.bf16.mxu0 %v2286
    %2414 = vmatpush1.bf16.msra.mxu0 %v2285
    %2415 = vmatprep.subr.bf16.mxu0 %v2288
    %2416 = vmatpush1.bf16.msra.mxu0 %v2287
    %2417 = vmatprep.mubr.bf16.mxu0 %v1990
    %2418 = vmatmul.mubr.bf16.gmra.mrb[0].mxu0 %v1989
    %v2419 = vpop.f32.mrb[0].mxu0
    %v2420 = vadd.f32 %v2060, %v2419
    %v2421 = vpop.f32.mrb[0].mxu0
    %v2422 = vadd.f32 %v2064, %v2421
    %v2423 = vpop.f32.mrb[0].mxu0
    %v2424 = vpop.f32.mrb[0].mxu0
    %2425 = vdwg.mxu0
    %2426 = vmatprep.subr.bf16.mxu0 %v2290
    %2427 = vmatpush1.bf16.msra.mxu0 %v2289
    %2428 = vmatprep.subr.bf16.mxu0 %v2292
    %2429 = vmatpush1.bf16.msra.mxu0 %v2291
    %2430 = vmatprep.subr.bf16.mxu0 %v2294
    %2431 = vmatpush1.bf16.msra.mxu0 %v2293
    %2432 = vmatprep.subr.bf16.mxu0 %v2296
    %2433 = vmatpush1.bf16.msra.mxu0 %v2295
    %2434 = vmatprep.subr.bf16.mxu0 %v2298
    %2435 = vmatpush1.bf16.msra.mxu0 %v2297
    %2436 = vmatprep.subr.bf16.mxu0 %v2300
    %2437 = vmatpush1.bf16.msra.mxu0 %v2299
    %2438 = vmatprep.subr.bf16.mxu0 %v2302
    %2439 = vmatpush1.bf16.msra.mxu0 %v2301
    %2440 = vmatprep.subr.bf16.mxu0 %v2304
    %2441 = vmatpush1.bf16.msra.mxu0 %v2303
    %2442 = vmatprep.subr.bf16.mxu0 %v2306
    %2443 = vmatpush1.bf16.msra.mxu0 %v2305
    %2444 = vmatprep.subr.bf16.mxu0 %v2308
    %2445 = vmatpush1.bf16.msra.mxu0 %v2307
    %2446 = vmatprep.subr.bf16.mxu0 %v2310
    %2447 = vmatpush1.bf16.msra.mxu0 %v2309
    %2448 = vmatprep.subr.bf16.mxu0 %v2312
    %2449 = vmatpush1.bf16.msra.mxu0 %v2311
    %2450 = vmatprep.subr.bf16.mxu0 %v2314
    %2451 = vmatpush1.bf16.msra.mxu0 %v2313
    %2452 = vmatprep.subr.bf16.mxu0 %v2316
    %2453 = vmatpush1.bf16.msra.mxu0 %v2315
    %2454 = vmatprep.subr.bf16.mxu0 %v2318
    %2455 = vmatpush1.bf16.msra.mxu0 %v2317
    %2456 = vmatprep.subr.bf16.mxu0 %v2320
    %2457 = vmatpush1.bf16.msra.mxu0 %v2319
    %2458 = vmatprep.mubr.bf16.mxu0 %v1992
    %2459 = vmatmul.mubr.bf16.gmra.mrb[0].mxu0 %v1991
    %v2460 = vpop.f32.mrb[0].mxu0
    %v2461 = vadd.f32 %v2420, %v2460
    %v2462 = vpop.f32.mrb[0].mxu0
    %v2463 = vadd.f32 %v2422, %v2462
    %v2464 = vpop.f32.mrb[0].mxu0
    %v2465 = vpop.f32.mrb[0].mxu0
    %2466 = vdwg.mxu0
    %v2467 = vmax.f32 %v2461, 0.0
    %v2468 = vmax.f32 %v2463, 0.0
    %v2469 = vpack.c.bf16 %v2467, %v2467
    %v2470 = vpack.c.bf16 %v2468, %v2468
    %v2471 = vld [vmem:[%s3] sm:$0xf]
    %v2472 = vld [vmem:[%s3 + $0x4] sm:$0xf]
    %v2473 = vld [vmem:[%s3 + $0x8] sm:$0xf]
    %v2474 = vld [vmem:[%s3 + $0xc] sm:$0xf]
    %v2475 = vld [vmem:[%s3 + $0x10] sm:$0xf]
    %v2476 = vld [vmem:[%s3 + $0x14] sm:$0xf]
    %v2477 = vld [vmem:[%s3 + $0x18] sm:$0xf]
    %v2478 = vld [vmem:[%s3 + $0x1c] sm:$0xf]
    %v2479 = vld [vmem:[%s3 + $0x20] sm:$0xf]
    %v2480 = vld [vmem:[%s3 + $0x24] sm:$0xf]
    %v2481 = vld [vmem:[%s3 + $0x28] sm:$0xf]
    %v2482 = vld [vmem:[%s3 + $0x2c] sm:$0xf]
    %v2483 = vld [vmem:[%s3 + $0x30] sm:$0xf]
    %v2484 = vld [vmem:[%s3 + $0x34] sm:$0xf]
    %v2485 = vld [vmem:[%s3 + $0x38] sm:$0xf]
    %v2486 = vld [vmem:[%s3 + $0x3c] sm:$0xf]
    %v2487 = vld [vmem:[%s3 + $0x40] sm:$0xf]
    %v2488 = vld [vmem:[%s3 + $0x44] sm:$0xf]
    %v2489 = vld [vmem:[%s3 + $0x48] sm:$0xf]
    %v2490 = vld [vmem:[%s3 + $0x4c] sm:$0xf]
    %v2491 = vld [vmem:[%s3 + $0x50] sm:$0xf]
    %v2492 = vld [vmem:[%s3 + $0x54] sm:$0xf]
    %v2493 = vld [vmem:[%s3 + $0x58] sm:$0xf]
    %v2494 = vld [vmem:[%s3 + $0x5c] sm:$0xf]
    %v2495 = vld [vmem:[%s3 + $0x60] sm:$0xf]
    %v2496 = vld [vmem:[%s3 + $0x64] sm:$0xf]
    %v2497 = vld [vmem:[%s3 + $0x68] sm:$0xf]
    %v2498 = vld [vmem:[%s3 + $0x6c] sm:$0xf]
    %v2499 = vld [vmem:[%s3 + $0x70] sm:$0xf]
    %v2500 = vld [vmem:[%s3 + $0x74] sm:$0xf]
    %v2501 = vld [vmem:[%s3 + $0x78] sm:$0xf]
    %v2502 = vld [vmem:[%s3 + $0x7c] sm:$0xf]
    %v2503 = vlaneseq
    %v2504 = vshrl.u32 %v2503, 7
    %v2505 = vsub.s32 2, %v2504
    %v2506 = vrot.slane %v85, %v2505
    %v2539 = vunpack.c.l.b16 %v2471
    %v2540 = vunpack.c.l.b16 %v2472
    %v2541 = vunpack.c.l.b16 %v2473
    %v2542 = vunpack.c.l.b16 %v2474
    %v2543 = vunpack.c.l.b16 %v2475
    %v2544 = vunpack.c.l.b16 %v2476
    %v2545 = vunpack.c.l.b16 %v2477
    %v2546 = vunpack.c.l.b16 %v2478
    %v2547 = vunpack.c.l.b16 %v2479
    %v2548 = vunpack.c.l.b16 %v2480
    %v2549 = vunpack.c.l.b16 %v2481
    %v2550 = vunpack.c.l.b16 %v2482
    %v2551 = vunpack.c.l.b16 %v2483
    %v2552 = vunpack.c.l.b16 %v2484
    %v2553 = vunpack.c.l.b16 %v2485
    %v2554 = vunpack.c.l.b16 %v2486
    %v2555 = vunpack.c.l.b16 %v2487
    %v2556 = vunpack.c.l.b16 %v2488
    %v2557 = vunpack.c.l.b16 %v2489
    %v2558 = vunpack.c.l.b16 %v2490
    %v2559 = vunpack.c.l.b16 %v2491
    %v2560 = vunpack.c.l.b16 %v2492
    %v2561 = vunpack.c.l.b16 %v2493
    %v2562 = vunpack.c.l.b16 %v2494
    %v2563 = vunpack.c.l.b16 %v2495
    %v2564 = vunpack.c.l.b16 %v2496
    %v2565 = vunpack.c.l.b16 %v2497
    %v2566 = vunpack.c.l.b16 %v2498
    %v2567 = vunpack.c.l.b16 %v2499
    %v2568 = vunpack.c.l.b16 %v2500
    %v2569 = vunpack.c.l.b16 %v2501
    %v2570 = vunpack.c.l.b16 %v2502
    %v2571 = vpack.c.b16 %v2540, %v2539
    %v2572 = vpack.c.b16 %v2542, %v2541
    %v2573 = vpack.c.b16 %v2544, %v2543
    %v2574 = vpack.c.b16 %v2546, %v2545
    %v2575 = vpack.c.b16 %v2548, %v2547
    %v2576 = vpack.c.b16 %v2550, %v2549
    %v2577 = vpack.c.b16 %v2552, %v2551
    %v2578 = vpack.c.b16 %v2554, %v2553
    %v2579 = vpack.c.b16 %v2556, %v2555
    %v2580 = vpack.c.b16 %v2558, %v2557
    %v2581 = vpack.c.b16 %v2560, %v2559
    %v2582 = vpack.c.b16 %v2562, %v2561
    %v2583 = vpack.c.b16 %v2564, %v2563
    %v2584 = vpack.c.b16 %v2566, %v2565
    %v2585 = vpack.c.b16 %v2568, %v2567
    %v2586 = vpack.c.b16 %v2570, %v2569
    %2603 = vmatprep.subr.bf16.mxu0 0
    %2604 = vmatpush1.bf16.msra.mxu0 %v2571
    %2605 = vmatprep.subr.bf16.mxu0 0
    %2606 = vmatpush1.bf16.msra.mxu0 %v2572
    %2607 = vmatprep.subr.bf16.mxu0 0
    %2608 = vmatpush1.bf16.msra.mxu0 %v2573
    %2609 = vmatprep.subr.bf16.mxu0 0
    %2610 = vmatpush1.bf16.msra.mxu0 %v2574
    %2611 = vmatprep.subr.bf16.mxu0 0
    %2612 = vmatpush1.bf16.msra.mxu0 %v2575
    %2613 = vmatprep.subr.bf16.mxu0 0
    %2614 = vmatpush1.bf16.msra.mxu0 %v2576
    %2615 = vmatprep.subr.bf16.mxu0 0
    %2616 = vmatpush1.bf16.msra.mxu0 %v2577
    %2617 = vmatprep.subr.bf16.mxu0 0
    %2618 = vmatpush1.bf16.msra.mxu0 %v2578
    %2619 = vmatprep.subr.bf16.mxu0 0
    %2620 = vmatpush1.bf16.msra.mxu0 %v2579
    %2621 = vmatprep.subr.bf16.mxu0 0
    %2622 = vmatpush1.bf16.msra.mxu0 %v2580
    %2623 = vmatprep.subr.bf16.mxu0 0
    %2624 = vmatpush1.bf16.msra.mxu0 %v2581
    %2625 = vmatprep.subr.bf16.mxu0 0
    %2626 = vmatpush1.bf16.msra.mxu0 %v2582
    %2627 = vmatprep.subr.bf16.mxu0 0
    %2628 = vmatpush1.bf16.msra.mxu0 %v2583
    %2629 = vmatprep.subr.bf16.mxu0 0
    %2630 = vmatpush1.bf16.msra.mxu0 %v2584
    %2631 = vmatprep.subr.bf16.mxu0 0
    %2632 = vmatpush1.bf16.msra.mxu0 %v2585
    %2633 = vmatprep.subr.bf16.mxu0 0
    %2634 = vmatpush1.bf16.msra.mxu0 %v2586
    %2635 = vmatprep.mubr.bf16.mxu0 %v2470
    %2636 = vmatmul.mubr.bf16.gmra.mrb[0].mxu0 %v2469
    %v2637 = vpop.f32.mrb[0].mxu0
    %v2638 = vadd.f32 %v2506, %v2637
    %v2639 = vpop.f32.mrb[0].mxu0
    %v2640 = vpop.f32.mrb[0].mxu0
    %v2641 = vpop.f32.mrb[0].mxu0
    %2642 = vdwg.mxu0
    %v2643 = vmax.f32 %v2638, 0.0
    %v2644 = vpack.c.bf16 %v2643, %v2643
    %v2645 = vld [vmem:[%s4] sm:$0xf]
    %v2646 = vld [vmem:[%s4 + $0x4] sm:$0xf]
    %v2647 = vld [vmem:[%s4 + $0x8] sm:$0xf]
    %v2648 = vld [vmem:[%s4 + $0xc] sm:$0xf]
    %v2649 = vld [vmem:[%s4 + $0x10] sm:$0xf]
    %v2650 = vld [vmem:[%s4 + $0x14] sm:$0xf]
    %v2651 = vld [vmem:[%s4 + $0x18] sm:$0xf]
    %v2652 = vld [vmem:[%s4 + $0x1c] sm:$0xf]
    %v2653 = vld [vmem:[%s4 + $0x20] sm:$0xf]
    %v2654 = vld [vmem:[%s4 + $0x24] sm:$0xf]
    %v2655 = vld [vmem:[%s4 + $0x28] sm:$0xf]
    %v2656 = vld [vmem:[%s4 + $0x2c] sm:$0xf]
    %v2657 = vld [vmem:[%s4 + $0x30] sm:$0xf]
    %v2658 = vld [vmem:[%s4 + $0x34] sm:$0xf]
    %v2659 = vld [vmem:[%s4 + $0x38] sm:$0xf]
    %v2660 = vld [vmem:[%s4 + $0x3c] sm:$0xf]
    %v2661 = vlaneseq
    %v2662 = vshrl.u32 %v2661, 7
    %v2663 = vsub.s32 3, %v2662
    %v2664 = vrot.slane %v85, %v2663
    %v2681 = vunpack.c.l.b16 %v2645
    %v2682 = vunpack.c.l.b16 %v2646
    %v2683 = vunpack.c.l.b16 %v2647
    %v2684 = vunpack.c.l.b16 %v2648
    %v2685 = vunpack.c.l.b16 %v2649
    %v2686 = vunpack.c.l.b16 %v2650
    %v2687 = vunpack.c.l.b16 %v2651
    %v2688 = vunpack.c.l.b16 %v2652
    %v2689 = vunpack.c.l.b16 %v2653
    %v2690 = vunpack.c.l.b16 %v2654
    %v2691 = vunpack.c.l.b16 %v2655
    %v2692 = vunpack.c.l.b16 %v2656
    %v2693 = vunpack.c.l.b16 %v2657
    %v2694 = vunpack.c.l.b16 %v2658
    %v2695 = vunpack.c.l.b16 %v2659
    %v2696 = vunpack.c.l.b16 %v2660
    %v2697 = vpack.c.b16 %v2682, %v2681
    %v2698 = vpack.c.b16 %v2684, %v2683
    %v2699 = vpack.c.b16 %v2686, %v2685
    %v2700 = vpack.c.b16 %v2688, %v2687
    %v2701 = vpack.c.b16 %v2690, %v2689
    %v2702 = vpack.c.b16 %v2692, %v2691
    %v2703 = vpack.c.b16 %v2694, %v2693
    %v2704 = vpack.c.b16 %v2696, %v2695
    %2713 = vmatprep.subr.bf16.mxu0 0
    %2714 = vmatpush1.bf16.msra.mxu0 %v2697
    %2715 = vmatprep.subr.bf16.mxu0 0
    %2716 = vmatpush1.bf16.msra.mxu0 %v2698
    %2717 = vmatprep.subr.bf16.mxu0 0
    %2718 = vmatpush1.bf16.msra.mxu0 %v2699
    %2719 = vmatprep.subr.bf16.mxu0 0
    %2720 = vmatpush1.bf16.msra.mxu0 %v2700
    %2721 = vmatprep.subr.bf16.mxu0 0
    %2722 = vmatpush1.bf16.msra.mxu0 %v2701
    %2723 = vmatprep.subr.bf16.mxu0 0
    %2724 = vmatpush1.bf16.msra.mxu0 %v2702
    %2725 = vmatprep.subr.bf16.mxu0 0
    %2726 = vmatpush1.bf16.msra.mxu0 %v2703
    %2727 = vmatprep.subr.bf16.mxu0 0
    %2728 = vmatpush1.bf16.msra.mxu0 %v2704
    %2729 = vmatprep.subr.bf16.mxu0 0
    %2730 = vmatpush1.bf16.msra.mxu0 0
    %2731 = vmatprep.subr.bf16.mxu0 0
    %2732 = vmatpush1.bf16.msra.mxu0 0
    %2733 = vmatprep.subr.bf16.mxu0 0
    %2734 = vmatpush1.bf16.msra.mxu0 0
    %2735 = vmatprep.subr.bf16.mxu0 0
    %2736 = vmatpush1.bf16.msra.mxu0 0
    %2737 = vmatprep.subr.bf16.mxu0 0
    %2738 = vmatpush1.bf16.msra.mxu0 0
    %2739 = vmatprep.subr.bf16.mxu0 0
    %2740 = vmatpush1.bf16.msra.mxu0 0
    %2741 = vmatprep.subr.bf16.mxu0 0
    %2742 = vmatpush1.bf16.msra.mxu0 0
    %2743 = vmatprep.subr.bf16.mxu0 0
    %2744 = vmatpush1.bf16.msra.mxu0 0
    %2745 = vmatprep.mubr.bf16.mxu0 0
    %2746 = vmatmul.mubr.bf16.gmra.mrb[0].mxu0 %v2644
    %v2747 = vpop.f32.mrb[0].mxu0
    %v2748 = vadd.f32 %v2664, %v2747
    %v2749 = vpop.f32.mrb[0].mxu0
    %v2750 = vpop.f32.mrb[0].mxu0
    %v2751 = vpop.f32.mrb[0].mxu0
    %2752 = vdwg.mxu0
    %v2753 = vmax.f32 %v2748, 0.0
    %v2754 = vpack.c.bf16 %v2753, %v2753
    %v2755 = vld [vmem:[#allocation6] sm:$0xf]
    %v2756 = vld [vmem:[#allocation6 + $0x4] sm:$0xf]
    %v2757 = vld [vmem:[#allocation6 + $0x8] sm:$0xf]
    %v2758 = vld [vmem:[#allocation6 + $0xc] sm:$0xf]
    %v2759 = vld [vmem:[#allocation6 + $0x10] sm:$0xf]
    %v2760 = vld [vmem:[#allocation6 + $0x14] sm:$0xf]
    %v2761 = vld [vmem:[#allocation6 + $0x18] sm:$0xf]
    %v2762 = vld [vmem:[#allocation6 + $0x1c] sm:$0xf]
    %v2763 = vld [vmem:[#allocation6 + $0x20] sm:$0xf]
    %v2764 = vld [vmem:[#allocation6 + $0x24] sm:$0xf]
    %v2765 = vld [vmem:[#allocation6 + $0x28] sm:$0xf]
    %v2766 = vld [vmem:[#allocation6 + $0x2c] sm:$0xf]
    %v2767 = vld [vmem:[#allocation6 + $0x30] sm:$0xf]
    %v2768 = vld [vmem:[#allocation6 + $0x34] sm:$0xf]
    %v2769 = vld [vmem:[#allocation6 + $0x38] sm:$0xf]
    %v2770 = vld [vmem:[#allocation6 + $0x3c] sm:$0xf]
    %v2771 = vlaneseq
    %v2772 = vshrl.u32 %v2771, 7
    %v2773 = vsub.s32 4, %v2772
    %v2774 = vrot.slane %v85, %v2773
    %v2791 = vunpack.c.l.b16 %v2755
    %v2792 = vunpack.c.l.b16 %v2756
    %v2793 = vunpack.c.l.b16 %v2757
    %v2794 = vunpack.c.l.b16 %v2758
    %v2795 = vunpack.c.l.b16 %v2759
    %v2796 = vunpack.c.l.b16 %v2760
    %v2797 = vunpack.c.l.b16 %v2761
    %v2798 = vunpack.c.l.b16 %v2762
    %v2799 = vunpack.c.l.b16 %v2763
    %v2800 = vunpack.c.l.b16 %v2764
    %v2801 = vunpack.c.l.b16 %v2765
    %v2802 = vunpack.c.l.b16 %v2766
    %v2803 = vunpack.c.l.b16 %v2767
    %v2804 = vunpack.c.l.b16 %v2768
    %v2805 = vunpack.c.l.b16 %v2769
    %v2806 = vunpack.c.l.b16 %v2770
    %v2807 = vpack.c.b16 %v2792, %v2791
    %v2808 = vpack.c.b16 %v2794, %v2793
    %v2809 = vpack.c.b16 %v2796, %v2795
    %v2810 = vpack.c.b16 %v2798, %v2797
    %v2811 = vpack.c.b16 %v2800, %v2799
    %v2812 = vpack.c.b16 %v2802, %v2801
    %v2813 = vpack.c.b16 %v2804, %v2803
    %v2814 = vpack.c.b16 %v2806, %v2805
    %2823 = vmatprep.subr.bf16.mxu0 0
    %2824 = vmatpush1.bf16.msra.mxu0 %v2807
    %2825 = vmatprep.subr.bf16.mxu0 0
    %2826 = vmatpush1.bf16.msra.mxu0 %v2808
    %2827 = vmatprep.subr.bf16.mxu0 0
    %2828 = vmatpush1.bf16.msra.mxu0 %v2809
    %2829 = vmatprep.subr.bf16.mxu0 0
    %2830 = vmatpush1.bf16.msra.mxu0 %v2810
    %2831 = vmatprep.subr.bf16.mxu0 0
    %2832 = vmatpush1.bf16.msra.mxu0 %v2811
    %2833 = vmatprep.subr.bf16.mxu0 0
    %2834 = vmatpush1.bf16.msra.mxu0 %v2812
    %2835 = vmatprep.subr.bf16.mxu0 0
    %2836 = vmatpush1.bf16.msra.mxu0 %v2813
    %2837 = vmatprep.subr.bf16.mxu0 0
    %2838 = vmatpush1.bf16.msra.mxu0 %v2814
    %2839 = vmatprep.subr.bf16.mxu0 0
    %2840 = vmatpush1.bf16.msra.mxu0 0
    %2841 = vmatprep.subr.bf16.mxu0 0
    %2842 = vmatpush1.bf16.msra.mxu0 0
    %2843 = vmatprep.subr.bf16.mxu0 0
    %2844 = vmatpush1.bf16.msra.mxu0 0
    %2845 = vmatprep.subr.bf16.mxu0 0
    %2846 = vmatpush1.bf16.msra.mxu0 0
    %2847 = vmatprep.subr.bf16.mxu0 0
    %2848 = vmatpush1.bf16.msra.mxu0 0
    %2849 = vmatprep.subr.bf16.mxu0 0
    %2850 = vmatpush1.bf16.msra.mxu0 0
    %2851 = vmatprep.subr.bf16.mxu0 0
    %2852 = vmatpush1.bf16.msra.mxu0 0
    %2853 = vmatprep.subr.bf16.mxu0 0
    %2854 = vmatpush1.bf16.msra.mxu0 0
    %2855 = vmatprep.mubr.bf16.mxu0 0
    %2856 = vmatmul.mubr.bf16.gmra.mrb[0].mxu0 %v2754
    %v2857 = vpop.f32.mrb[0].mxu0
    %v2858 = vadd.f32 %v2774, %v2857
    %v2859 = vpop.f32.mrb[0].mxu0
    %v2860 = vpop.f32.mrb[0].mxu0
    %v2861 = vpop.f32.mrb[0].mxu0
    %2862 = vdwg.mxu0
    %v2863 = vmax.f32 %v2858, 0.0
    %v2864 = vpack.c.bf16 %v2863, %v2863
    %v2865 = vld [vmem:[#allocation7] sm:$0xf]
    %v2866 = vld [vmem:[#allocation7 + $0x4] sm:$0xf]
    %v2867 = vld [vmem:[#allocation7 + $0x8] sm:$0xf]
    %v2868 = vld [vmem:[#allocation7 + $0xc] sm:$0xf]
    %v2869 = vld [vmem:[#allocation7 + $0x10] sm:$0xf]
    %v2870 = vld [vmem:[#allocation7 + $0x14] sm:$0xf]
    %v2871 = vld [vmem:[#allocation7 + $0x18] sm:$0xf]
    %v2872 = vld [vmem:[#allocation7 + $0x1c] sm:$0xf]
    %v2873 = vld [vmem:[#allocation7 + $0x20] sm:$0xf]
    %v2874 = vld [vmem:[#allocation7 + $0x24] sm:$0xf]
    %v2875 = vld [vmem:[#allocation7 + $0x28] sm:$0xf]
    %v2876 = vld [vmem:[#allocation7 + $0x2c] sm:$0xf]
    %v2877 = vld [vmem:[#allocation7 + $0x30] sm:$0xf]
    %v2878 = vld [vmem:[#allocation7 + $0x34] sm:$0xf]
    %v2879 = vld [vmem:[#allocation7 + $0x38] sm:$0xf]
    %v2880 = vld [vmem:[#allocation7 + $0x3c] sm:$0xf]
    %v2881 = vlaneseq
    %v2882 = vshrl.u32 %v2881, 7
    %v2883 = vsub.s32 5, %v2882
    %v2884 = vrot.slane %v85, %v2883
    %v2901 = vunpack.c.l.b16 %v2865
    %v2902 = vunpack.c.l.b16 %v2866
    %v2903 = vunpack.c.l.b16 %v2867
    %v2904 = vunpack.c.l.b16 %v2868
    %v2905 = vunpack.c.l.b16 %v2869
    %v2906 = vunpack.c.l.b16 %v2870
    %v2907 = vunpack.c.l.b16 %v2871
    %v2908 = vunpack.c.l.b16 %v2872
    %v2909 = vunpack.c.l.b16 %v2873
    %v2910 = vunpack.c.l.b16 %v2874
    %v2911 = vunpack.c.l.b16 %v2875
    %v2912 = vunpack.c.l.b16 %v2876
    %v2913 = vunpack.c.l.b16 %v2877
    %v2914 = vunpack.c.l.b16 %v2878
    %v2915 = vunpack.c.l.b16 %v2879
    %v2916 = vunpack.c.l.b16 %v2880
    %v2917 = vpack.c.b16 %v2902, %v2901
    %v2918 = vpack.c.b16 %v2904, %v2903
    %v2919 = vpack.c.b16 %v2906, %v2905
    %v2920 = vpack.c.b16 %v2908, %v2907
    %v2921 = vpack.c.b16 %v2910, %v2909
    %v2922 = vpack.c.b16 %v2912, %v2911
    %v2923 = vpack.c.b16 %v2914, %v2913
    %v2924 = vpack.c.b16 %v2916, %v2915
    %2933 = vmatprep.subr.bf16.mxu0 0
    %2934 = vmatpush1.bf16.msra.mxu0 %v2917
    %2935 = vmatprep.subr.bf16.mxu0 0
    %2936 = vmatpush1.bf16.msra.mxu0 %v2918
    %2937 = vmatprep.subr.bf16.mxu0 0
    %2938 = vmatpush1.bf16.msra.mxu0 %v2919
    %2939 = vmatprep.subr.bf16.mxu0 0
    %2940 = vmatpush1.bf16.msra.mxu0 %v2920
    %2941 = vmatprep.subr.bf16.mxu0 0
    %2942 = vmatpush1.bf16.msra.mxu0 %v2921
    %2943 = vmatprep.subr.bf16.mxu0 0
    %2944 = vmatpush1.bf16.msra.mxu0 %v2922
    %2945 = vmatprep.subr.bf16.mxu0 0
    %2946 = vmatpush1.bf16.msra.mxu0 %v2923
    %2947 = vmatprep.subr.bf16.mxu0 0
    %2948 = vmatpush1.bf16.msra.mxu0 %v2924
    %2949 = vmatprep.subr.bf16.mxu0 0
    %2950 = vmatpush1.bf16.msra.mxu0 0
    %2951 = vmatprep.subr.bf16.mxu0 0
    %2952 = vmatpush1.bf16.msra.mxu0 0
    %2953 = vmatprep.subr.bf16.mxu0 0
    %2954 = vmatpush1.bf16.msra.mxu0 0
    %2955 = vmatprep.subr.bf16.mxu0 0
    %2956 = vmatpush1.bf16.msra.mxu0 0
    %2957 = vmatprep.subr.bf16.mxu0 0
    %2958 = vmatpush1.bf16.msra.mxu0 0
    %2959 = vmatprep.subr.bf16.mxu0 0
    %2960 = vmatpush1.bf16.msra.mxu0 0
    %2961 = vmatprep.subr.bf16.mxu0 0
    %2962 = vmatpush1.bf16.msra.mxu0 0
    %2963 = vmatprep.subr.bf16.mxu0 0
    %2964 = vmatpush1.bf16.msra.mxu0 0
    %2965 = vmatprep.mubr.bf16.mxu0 0
    %2966 = vmatmul.mubr.bf16.gmra.mrb[0].mxu0 %v2864
    %v2967 = vpop.f32.mrb[0].mxu0
    %v2968 = vadd.f32 %v2884, %v2967
    %v2969 = vpop.f32.mrb[0].mxu0
    %v2970 = vpop.f32.mrb[0].mxu0
    %v2971 = vpop.f32.mrb[0].mxu0
    %2972 = vdwg.mxu0
    %v2973 = vlaneseq
    %v2974 = vand.u32 %v2973, 127
    %vm2975 = vcmp.lt.s32.totalorder %v2974, 10
    %v2976 = vsel %vm2975, %v2968, -1e+30
    %2977 = vmax.xlane.f32.xlu0 %v2976
    %v2978 = vpop.xlane.xlu0 %2977
    %v2979 = vsub.f32 %v2976, %v2978
    %v2980 = vmul.f32 %v2979, 1.442695
    %v2981 = vpow.pop %v2980
    %2982 = vadd.xlane.f32.xlu0 %v2981
    %v2983 = vpop.xlane.xlu0 %2982
    %v2984 = vlog2.pop %v2983
    %v2985 = vmul.f32 %v2984, 0.6931472
    %v2986 = vsub.f32 %v2979, %v2985
    %2987 = vst [vmem:[%s8] sm:$0xff] %v2986
    // Predicated region
    $region50: #{modified_classifier_forward.1} parent=1 // pred_check
      _
    $region51: #{modified_classifier_forward.1} parent=1 // pred_check_branch
      %2989 = sbr.rel (0) target = $region53
    $region52: #{modified_classifier_forward.1} parent=1 // pred_region
      _
    $region53: #{modified_classifier_forward.1} parent=1 // pred_fallthru
      _
    // Predicated region
    $region54: #{modified_classifier_forward.1} parent=1 // pred_check
      _
    $region55: #{modified_classifier_forward.1} parent=1 // pred_check_branch
      %2991 = sbr.rel (0) target = $region57
    $region56: #{modified_classifier_forward.1} parent=1 // pred_region
      _
    $region57: #{modified_classifier_forward.1} parent=1 // pred_fallthru
      _
    %2992 = vsyncpa [#allocation3], 1
    %2993 = vsyncpa [#allocation5], 1
    %2994 = vsyncpa [#allocation8], 1

</llo_original>
